<compile_context>
chip_gen: v5e
topology: v5e:2x2
jax: 0.10.0
libtpu: 0.0.40
codegen_flags: <defaults>
</compile_context>

<pallas_src>
import functools

import jax
import jax.numpy as jnp
from jax.experimental import pallas as pl
from jax.experimental.pallas import tpu as pltpu


def _round_up(x, m):
    return (x + m - 1) // m * m


def _sage_kernel(a_ref, hsrc_ref, hdst_ref, ws_ref, wn_ref, b_ref, o_ref,
                 acc_ref, *, tile_k, hsrc_resident):
    """Grid = (dest-row tiles, source-node tiles); reduction axis is last."""
    k = pl.program_id(1)

    @pl.when(k == 0)
    def _():
        acc_ref[...] = jnp.zeros_like(acc_ref)

    # Aggregation on the MXU as bf16 x bf16 with an f32 VMEM accumulator.
    # int8 0/1 adjacency -> bf16 widen on the VPU (exact).  Column 0 of the
    # feature matrix is all ones, so acc[:, 0] accumulates the in-degree and
    # acc[:, 1:] the summed neighbor messages in the same matmul.
    a = a_ref[...].astype(jnp.bfloat16)
    if hsrc_resident:
        start = pl.multiple_of(k * tile_k, tile_k)
        h = hsrc_ref[pl.ds(start, tile_k), :]
    else:
        h = hsrc_ref[...]
    acc_ref[...] += jnp.dot(a, h, preferred_element_type=jnp.float32)

    @pl.when(k == pl.num_programs(1) - 1)
    def _():
        acc = acc_ref[...]
        degs = acc[:, :1]                                 # [tile_m, 1] in-degrees
        # Exact reciprocal: runs once per row tile so it is essentially free.
        # NOTE: max(deg, 1) maps isolated nodes to a zero neighbor mean; the
        # dense torch reference would divide by zero (NaN/Inf) there.
        inv_deg = 1.0 / jnp.maximum(degs, 1.0)
        hk_neigh = acc * inv_deg                          # mean aggregation
        # Two K=Fin_p dots (self + neighbor halves) accumulated into one f32
        # result; avoids the VMEM copy a jnp.concatenate would materialize.
        out = jnp.dot(hdst_ref[...].astype(jnp.float32), ws_ref[...],
                      preferred_element_type=jnp.float32)
        out = out + jnp.dot(hk_neigh, wn_ref[...],
                            preferred_element_type=jnp.float32)
        out = out + b_ref[...]
        o_ref[...] = jnp.maximum(out, 0.0).astype(o_ref.dtype)   # ReLU


def sage_conv(adj, feat, W, b, *, tile_m=256, tile_k=512):
    """adj: [N,N] 0/1 (unweighted!), feat: [N,Fin], W: [Fout, 2*Fin] (torch
    Linear layout), b: [Fout].  Returns relu(concat(h, neigh/deg) @ W.T + b),
    shape [N, Fout]."""
    N, Fin = feat.shape
    Fout = W.shape[0]

    # Lane padding.  +1 lane in Fin_p is reserved for the ones/degree column.
    Fin_p = _round_up(Fin + 1, 128)
    Fout_p = _round_up(Fout, 128)

    # Tile selection: shrink for tiny graphs, keep tile_k a multiple of tile_m
    # so a single padded node count serves both the row and contraction axes.
    n128 = _round_up(N, 128)
    tile_m = min(tile_m, n128)
    tile_k = max(tile_m, min(tile_k, n128))
    tile_k = (tile_k // tile_m) * tile_m
    Np = _round_up(N, tile_k)
    # Keep >= 2 row tiles when possible so the "parallel" axis can shard
    # across v7x's two TensorCores.
    if Np // tile_m < 2 and tile_m >= 256:
        tile_m //= 2

    # Adjacency: int8 (0/1 exact), 1 byte/element on the dominant HBM stream.
    # Avoid the pad/copy pass when the caller already hands us a padded
    # (and/or already-int8) matrix.
    if adj.shape == (Np, Np) and adj.dtype == jnp.int8:
        a_pad = adj
    elif adj.shape == (Np, Np):
        a_pad = adj.astype(jnp.int8)
    else:
        a_pad = jnp.zeros((Np, Np), jnp.int8).at[:N, :N].set(
            adj.astype(jnp.int8))

    # Features in bf16: column 0 = 1 (degree column), columns 1..Fin = feats.
    h_pad = jnp.zeros((Np, Fin_p), jnp.bfloat16)
    h_pad = h_pad.at[:N, 1:1 + Fin].set(feat.astype(jnp.bfloat16))
    h_pad = h_pad.at[:N, 0].set(1.0)

    # Torch weight [Fout, 2*Fin] split into the self / neighbor halves, laid
    # out to match the padded feature columns (row 0 = ones column -> zero).
    Wt = W.T.astype(jnp.float32)                          # [2*Fin, Fout]
    w_self = jnp.zeros((Fin_p, Fout_p), jnp.float32).at[1:1 + Fin, :Fout].set(
        Wt[:Fin])
    w_neigh = jnp.zeros((Fin_p, Fout_p), jnp.float32).at[1:1 + Fin, :Fout].set(
        Wt[Fin:])
    b_pad = jnp.zeros((1, Fout_p), jnp.float32).at[0, :Fout].set(
        b.astype(jnp.float32))

    # Keep the whole source-feature matrix VMEM-resident when it comfortably
    # fits (conservative: assume it may be double-buffered; stay well inside
    # v7x's 64 MiB physical VMEM).
    hsrc_bytes = Np * Fin_p * 2
    hsrc_resident = hsrc_bytes <= 12 * 1024 * 1024

    if hsrc_resident:
        hsrc_spec = pl.BlockSpec((Np, Fin_p), lambda i, k: (0, 0))
    else:
        hsrc_spec = pl.BlockSpec((tile_k, Fin_p), lambda i, k: (k, 0))

    out_itemsize = jnp.dtype(feat.dtype).itemsize
    est_vmem = (2 * tile_m * tile_k                       # int8 A, double-buffered
                + (2 * hsrc_bytes if hsrc_resident else 2 * tile_k * Fin_p * 2)
                + 2 * tile_m * Fin_p * 2                  # hdst (bf16)
                + 2 * 2 * Fin_p * Fout_p * 4              # W_self + W_neigh (f32)
                + 2 * Fout_p * 4                          # bias
                + 2 * tile_m * Fout_p * out_itemsize      # output
                + tile_m * Fin_p * 4)                     # f32 accumulator
    vmem_limit = int(min(max(2 * est_vmem, 32 * 1024 * 1024),
                         56 * 1024 * 1024))

    grid = (Np // tile_m, Np // tile_k)

    kernel = functools.partial(_sage_kernel, tile_k=tile_k,
                               hsrc_resident=hsrc_resident)

    out_pad = pl.pallas_call(
        kernel,
        out_shape=jax.ShapeDtypeStruct((Np, Fout_p), feat.dtype),
        grid_spec=pltpu.PrefetchScalarGridSpec(
            num_scalar_prefetch=0,
            grid=grid,
            in_specs=[
                pl.BlockSpec((tile_m, tile_k), lambda i, k: (i, k)),   # A (int8)
                hsrc_spec,                                             # h (sources)
                pl.BlockSpec((tile_m, Fin_p), lambda i, k: (i, 0)),    # h (dest rows)
                pl.BlockSpec((Fin_p, Fout_p), lambda i, k: (0, 0)),    # W_self
                pl.BlockSpec((Fin_p, Fout_p), lambda i, k: (0, 0)),    # W_neigh
                pl.BlockSpec((1, Fout_p), lambda i, k: (0, 0)),        # bias
            ],
            out_specs=pl.BlockSpec((tile_m, Fout_p), lambda i, k: (i, 0)),
            scratch_shapes=[pltpu.VMEM((tile_m, Fin_p), jnp.float32)],
        ),
        compiler_params=pltpu.CompilerParams(
            dimension_semantics=("parallel", "arbitrary"),
            vmem_limit_bytes=vmem_limit,
        ),
    )(a_pad, h_pad, h_pad, w_self, w_neigh, b_pad)

    return out_pad[:N, :Fout]


if __name__ == "__main__":
    key = jax.random.PRNGKey(0)
    k_adj, k_feat, k_w, k_b = jax.random.split(key, 4)

    N, Fin, Fout = 256, 32, 64

    # Deterministic random graph; add self-loops so every in-degree >= 1.
    adj = (jax.random.uniform(k_adj, (N, N)) < 0.25).astype(jnp.float32)
    adj = jnp.maximum(adj, jnp.eye(N, dtype=jnp.float32))

    feat = jax.random.normal(k_feat, (N, Fin), dtype=jnp.float32)

    # nn.Linear(2*Fin, Fout): W [Fout, 2*Fin], b [Fout].
    bound = 1.0 / jnp.sqrt(2.0 * Fin)
    W = jax.random.uniform(k_w, (Fout, 2 * Fin), minval=-bound, maxval=bound,
                           dtype=jnp.float32)
    b = jax.random.uniform(k_b, (Fout,), minval=-bound, maxval=bound,
                           dtype=jnp.float32)

    out = sage_conv(adj, feat, W, b)
    out = jax.block_until_ready(out)

    # Pure-JAX reference (same math as the PyTorch module with ReLU).
    neigh = adj @ feat
    degs = adj.sum(axis=-1, keepdims=True)
    ref = jnp.maximum(
        jnp.concatenate([feat, neigh / degs], axis=-1) @ W.T + b, 0.0)

    # Tolerance covers the bf16 quantization of the feature operand in the
    # aggregation / epilogue (accumulation is f32 throughout).
    assert out.shape == ref.shape
    assert jnp.allclose(out, ref, atol=2e-2, rtol=2e-2), (
        "mismatch vs reference, max abs err = %s" % jnp.max(jnp.abs(out - ref)))

    print("KERNEL_OK")
</pallas_src>

<mosaic_0001>
module attributes {stable_mosaic.version = 11 : i64} {
  func.func @_sage_kernel(%arg0: i32, %arg1: i32, %arg2: memref<128x256xi8, #tpu.memory_space<vmem>>, %arg3: memref<256x128xbf16, #tpu.memory_space<vmem>>, %arg4: memref<128x128xbf16, #tpu.memory_space<vmem>>, %arg5: memref<128x128xf32, #tpu.memory_space<vmem>>, %arg6: memref<128x128xf32, #tpu.memory_space<vmem>>, %arg7: memref<1x128xf32, #tpu.memory_space<vmem>>, %arg8: memref<128x128xf32, #tpu.memory_space<vmem>>, %arg9: memref<128x128xf32, #tpu.memory_space<vmem>>) attributes {dimension_semantics = [#tpu.dimension_semantics<parallel>, #tpu.dimension_semantics<arbitrary>], iteration_bounds = array<i64: 2, 1>, scalar_prefetch = 0 : i64, scratch_operands = 1 : i64, tpu.core_type = #tpu.core_type<tc>, window_params = [{transform_indices = @transform_0, window_bounds = array<i64: 128, 256>}, {pipeline_mode = #tpu.pipeline_mode<synchronous>, transform_indices = @transform_1, window_bounds = array<i64: 256, 128>}, {transform_indices = @transform_2, window_bounds = array<i64: 128, 128>}, {pipeline_mode = #tpu.pipeline_mode<synchronous>, transform_indices = @transform_3, window_bounds = array<i64: 128, 128>}, {pipeline_mode = #tpu.pipeline_mode<synchronous>, transform_indices = @transform_4, window_bounds = array<i64: 128, 128>}, {pipeline_mode = #tpu.pipeline_mode<synchronous>, transform_indices = @transform_5, window_bounds = array<i64: 1, 128>}, {transform_indices = @transform_6, window_bounds = array<i64: 128, 128>}]} {
    %c0_i32 = arith.constant 0 : i32
    %0 = arith.cmpi eq, %arg1, %c0_i32 : i32
    %1 = arith.extui %0 : i1 to i32
    %c0_i32_0 = arith.constant 0 : i32
    %2 = arith.cmpi ne, %1, %c0_i32_0 : i32
    scf.if %2 {
      %cst_9 = arith.constant 0.000000e+00 : f32
      %16 = vector.broadcast %cst_9 : f32 to vector<128x128xf32>
      %c0_10 = arith.constant 0 : index
      %c0_11 = arith.constant 0 : index
      %17 = vector.load %arg9[%c0_10, %c0_11] : memref<128x128xf32, #tpu.memory_space<vmem>>, vector<128x128xf32>
      tpu.vector_store %arg9[%c0_10, %c0_11], %16 {strides = array<i32>} : memref<128x128xf32, #tpu.memory_space<vmem>>, vector<128x128xf32>,
    } else {
    }
    %c0 = arith.constant 0 : index
    %c0_1 = arith.constant 0 : index
    %3 = vector.load %arg2[%c0, %c0_1] : memref<128x256xi8, #tpu.memory_space<vmem>>, vector<128x256xi8>
    %4 = arith.sitofp %3 : vector<128x256xi8> to vector<128x256xbf16>
    %c256_i32 = arith.constant 256 : i32
    %5 = arith.muli %arg1, %c256_i32 : i32
    %6 = tpu.assume_multiple %5, 256 : i32
    %7 = arith.index_cast %6 : i32 to index
    %c0_2 = arith.constant 0 : index
    %8 = vector.load %arg3[%7, %c0_2] : memref<256x128xbf16, #tpu.memory_space<vmem>>, vector<256x128xbf16>
    %c0_3 = arith.constant 0 : index
    %c0_4 = arith.constant 0 : index
    %9 = vector.load %arg9[%c0_3, %c0_4] : memref<128x128xf32, #tpu.memory_space<vmem>>, vector<128x128xf32>
    %cst = arith.constant dense<0.000000e+00> : vector<128x128xf32>
    %10 = tpu.matmul %4, %8, %cst {dimension_numbers = #tpu.dot_dimension_numbers<[1], [0], [0], [1], [0, 0, 1, 1], [], []>} : vector<128x256xbf16>, vector<256x128xbf16>, vector<128x128xf32> -> vector<128x128xf32>
    %11 = arith.addf %9, %10 : vector<128x128xf32>
    %c0_5 = arith.constant 0 : index
    %c0_6 = arith.constant 0 : index
    %12 = vector.load %arg9[%c0_5, %c0_6] : memref<128x128xf32, #tpu.memory_space<vmem>>, vector<128x128xf32>
    tpu.vector_store %arg9[%c0_5, %c0_6], %11 {strides = array<i32>} : memref<128x128xf32, #tpu.memory_space<vmem>>, vector<128x128xf32>,
    %c0_i32_7 = arith.constant 0 : i32
    %13 = arith.cmpi eq, %arg1, %c0_i32_7 : i32
    %14 = arith.extui %13 : i1 to i32
    %c0_i32_8 = arith.constant 0 : i32
    %15 = arith.cmpi ne, %14, %c0_i32_8 : i32
    scf.if %15 {
      %c0_9 = arith.constant 0 : index
      %c0_10 = arith.constant 0 : index
      %16 = vector.load %arg9[%c0_9, %c0_10] : memref<128x128xf32, #tpu.memory_space<vmem>>, vector<128x128xf32>
      %17 = vector.extract_strided_slice %16 {offsets = [0, 0], sizes = [128, 1], strides = [1, 1]} : vector<128x128xf32> to vector<128x1xf32>
      %cst_11 = arith.constant 1.000000e+00 : f32
      %18 = vector.broadcast %cst_11 : f32 to vector<128x1xf32>
      %19 = arith.maximumf %17, %18 : vector<128x1xf32>
      %cst_12 = arith.constant 1.000000e+00 : f32
      %20 = vector.broadcast %cst_12 : f32 to vector<128x1xf32>
      %21 = arith.divf %20, %19 : vector<128x1xf32>
      %22 = vector.broadcast %21 : vector<128x1xf32> to vector<128x128xf32>
      %23 = arith.mulf %16, %22 : vector<128x128xf32>
      %c0_13 = arith.constant 0 : index
      %c0_14 = arith.constant 0 : index
      %24 = vector.load %arg4[%c0_13, %c0_14] : memref<128x128xbf16, #tpu.memory_space<vmem>>, vector<128x128xbf16>
      %25 = arith.extf %24 : vector<128x128xbf16> to vector<128x128xf32>
      %c0_15 = arith.constant 0 : index
      %c0_16 = arith.constant 0 : index
      %26 = vector.load %arg5[%c0_15, %c0_16] : memref<128x128xf32, #tpu.memory_space<vmem>>, vector<128x128xf32>
      %cst_17 = arith.constant dense<0.000000e+00> : vector<128x128xf32>
      %27 = tpu.matmul %25, %26, %cst_17 {dimension_numbers = #tpu.dot_dimension_numbers<[1], [0], [0], [1], [0, 0, 1, 1], [], []>} : vector<128x128xf32>, vector<128x128xf32>, vector<128x128xf32> -> vector<128x128xf32>
      %c0_18 = arith.constant 0 : index
      %c0_19 = arith.constant 0 : index
      %28 = vector.load %arg6[%c0_18, %c0_19] : memref<128x128xf32, #tpu.memory_space<vmem>>, vector<128x128xf32>
      %cst_20 = arith.constant dense<0.000000e+00> : vector<128x128xf32>
      %29 = tpu.matmul %23, %28, %cst_20 {dimension_numbers = #tpu.dot_dimension_numbers<[1], [0], [0], [1], [0, 0, 1, 1], [], []>} : vector<128x128xf32>, vector<128x128xf32>, vector<128x128xf32> -> vector<128x128xf32>
      %30 = arith.addf %27, %29 : vector<128x128xf32>
      %c0_21 = arith.constant 0 : index
      %c0_22 = arith.constant 0 : index
      %31 = vector.load %arg7[%c0_21, %c0_22] : memref<1x128xf32, #tpu.memory_space<vmem>>, vector<1x128xf32>
      %32 = vector.broadcast %31 : vector<1x128xf32> to vector<128x128xf32>
      %33 = arith.addf %30, %32 : vector<128x128xf32>
      %cst_23 = arith.constant 0.000000e+00 : f32
      %34 = vector.broadcast %cst_23 : f32 to vector<128x128xf32>
      %35 = arith.maximumf %33, %34 : vector<128x128xf32>
      %c0_24 = arith.constant 0 : index
      %c0_25 = arith.constant 0 : index
      %36 = vector.load %arg8[%c0_24, %c0_25] : memref<128x128xf32, #tpu.memory_space<vmem>>, vector<128x128xf32>
      tpu.vector_store %arg8[%c0_24, %c0_25], %35 {strides = array<i32>} : memref<128x128xf32, #tpu.memory_space<vmem>>, vector<128x128xf32>,
    } else {
    }
    return
  }
  func.func @transform_0(%arg0: i32, %arg1: i32) -> (i32, i32) {
    %c0_i32 = arith.constant 0 : i32
    return %arg0, %arg1 : i32, i32
  }
  func.func @transform_1(%arg0: i32, %arg1: i32) -> (i32, i32) {
    %c0_i32 = arith.constant 0 : i32
    %c0_i32_0 = arith.constant 0 : i32
    %c0_i32_1 = arith.constant 0 : i32
    return %c0_i32, %c0_i32_0 : i32, i32
  }
  func.func @transform_2(%arg0: i32, %arg1: i32) -> (i32, i32) {
    %c0_i32 = arith.constant 0 : i32
    %c0_i32_0 = arith.constant 0 : i32
    return %arg0, %c0_i32 : i32, i32
  }
  func.func @transform_3(%arg0: i32, %arg1: i32) -> (i32, i32) {
    %c0_i32 = arith.constant 0 : i32
    %c0_i32_0 = arith.constant 0 : i32
    %c0_i32_1 = arith.constant 0 : i32
    return %c0_i32, %c0_i32_0 : i32, i32
  }
  func.func @transform_4(%arg0: i32, %arg1: i32) -> (i32, i32) {
    %c0_i32 = arith.constant 0 : i32
    %c0_i32_0 = arith.constant 0 : i32
    %c0_i32_1 = arith.constant 0 : i32
    return %c0_i32, %c0_i32_0 : i32, i32
  }
  func.func @transform_5(%arg0: i32, %arg1: i32) -> (i32, i32) {
    %c0_i32 = arith.constant 0 : i32
    %c0_i32_0 = arith.constant 0 : i32
    %c0_i32_1 = arith.constant 0 : i32
    return %c0_i32, %c0_i32_0 : i32, i32
  }
  func.func @transform_6(%arg0: i32, %arg1: i32) -> (i32, i32) {
    %c0_i32 = arith.constant 0 : i32
    %c0_i32_0 = arith.constant 0 : i32
    return %arg0, %c0_i32 : i32, i32
  }
}

</mosaic_0001>

<llo_original>
// kernel: tpu_custom_call.1
$region0: #{tpu_custom_call.1}
  #allocation0 [shape = 'u32[]', space=smem, size = 0x4, offset = 0x4, fixed_abs, tag = 'smem constant byte address 0x4 - core index']
  #allocation1 [shape = 'u32[72,128]{1,0:T(1,128)}', space=vmem, size = 0x9000, scoped, tag = 'internal scratch']
  #allocation2 [shape = 'f32[128,128]{1,0:T(8,128)}', space=vmem, size = 0x10000, scoped, tag = 'scratch operand']
  %s0 = inlined_call_operand.hbm [shape: s8[256,256], index: 0, kind: input, shape index: {}]
  %s1 = inlined_call_operand.hbm [shape: bf16[256,128], index: 1, kind: input, shape index: {}]
  %s2 = inlined_call_operand.hbm [shape: bf16[256,128], index: 2, kind: input, shape index: {}]
  %s3 = inlined_call_operand.hbm [shape: f32[128,128], index: 3, kind: input, shape index: {}]
  %s4 = inlined_call_operand.hbm [shape: f32[128,128], index: 4, kind: input, shape index: {}]
  %s5 = inlined_call_operand.vmem [shape: f32[1,128], index: 5, kind: input, shape index: {}]
  %s6 = inlined_call_operand.hbm [shape: f32[256,128], index: 6, kind: output, shape index: {}]
  %s7 = sld [smem:[#allocation0]]
  $region85: #{tpu_custom_call.1} parent=0
    _
  %s9 = ssub.s32 1, %s7
  %s10 = scalar_select 0, %s9, %s7
  $region1: #{tpu_custom_call.1} parent=0
    #allocation3 [shape = 'u8[65536]{0}', space=vmem, size = 0x10000, scoped, tag = 'input window, operand 0']
    #allocation4 [shape = 's32[2]{0}', space=sflag, size = 0x8, scoped, tag = 'scoped memory for tpu_custom_call.1']
    #allocation5 [shape = 's32[2]{0}', space=sflag, size = 0x8, scoped, tag = 'scoped memory for tpu_custom_call.1']
    #allocation6 [shape = 'u8[65536]{0}', space=vmem, size = 0x10000, scoped, tag = 'input window, operand 1, single buffered']
    #allocation7 [shape = 's32[1]{0}', space=sflag, size = 0x4, scoped, tag = 'scoped memory for tpu_custom_call.1']
    #allocation8 [shape = 'u8[65536]{0}', space=vmem, size = 0x10000, scoped, tag = 'input window, operand 2']
    #allocation9 [shape = 'u8[65536]{0}', space=vmem, size = 0x10000, scoped, tag = 'input window, operand 3, single buffered']
    #allocation10 [shape = 'u8[65536]{0}', space=vmem, size = 0x10000, scoped, tag = 'input window, operand 4, single buffered']
    #allocation11 [shape = 's32[1]{0}', space=sflag, size = 0x4, scoped, tag = 'scoped memory for tpu_custom_call.1']
    #allocation12 [shape = 'u8[131072]{0}', space=vmem, size = 0x20000, scoped, tag = 'output window, operand 0']
    %11 = vsyncpa [#allocation4], 0
    %s12 = scalar_lea.sflag [#allocation4], 1
    %13 = vsyncpa %s12, 0
    %14 = vsyncpa [#allocation7], 0
    %15 = vsyncpa [#allocation11], 0
    %16 = vsyncpa [#allocation5], 0
    %s17 = scalar_lea.sflag [#allocation5], 1
    %18 = vsyncpa %s17, 0
    loop: start=0, step=1, limit=4
    $region2: #{tpu_custom_call.1} parent=1 // loop_pre_header
      _
    $region3: #{tpu_custom_call.1} parent=1 // loop_header
      %s20 = sphi 0, %s24
      %p21 = scmp.ge.s32.totalorder %s20, 4
      %s27 = sphi 0, %s39
      %s28 = sphi 0, %s35
      %s29 = sphi 0, %s27
      %s30 = sphi 0, %s28
      %s31 = sphi 0, %s29
      %s32 = sphi 0, %s30
      %s44 = sphi 0, %s46
      %s47 = sphi 0, %s44
      %s48 = sphi 0, %s47
      %s64 = sphi 0, %s48
      %s68 = sphi 0, %s68
      %s70 = sphi 0, %s68
      %s71 = sphi 0, %s70
      %s85 = sphi 0, %s71
      %s91 = sphi 0, %s93
      %s94 = sphi 0, %s91
      %s95 = sphi 0, %s94
      %s111 = sphi 0, %s95
      %s115 = sphi 0, %s115
      %s117 = sphi 0, %s115
      %s118 = sphi 0, %s117
      %s132 = sphi 0, %s118
      %s136 = sphi 0, %s136
      %s138 = sphi 0, %s136
      %s139 = sphi 0, %s138
      %s153 = sphi 0, %s139
      %s157 = sphi 0, %s157
      %s159 = sphi 0, %s157
      %s160 = sphi 0, %s159
      %s174 = sphi 0, %s160
      %s180 = sphi 0, %s182
      %s183 = sphi 0, %s180
      %s184 = sphi 0, %s183
      %s200 = sphi 0, %s184
    $region4: #{tpu_custom_call.1} parent=1 // loop_header_branch
      %23 = sbr.rel (%p21) target = $region8
    $region5: #{tpu_custom_call.1} parent=1 // loop_body
      %s25 = ssub.s32 %s20, 1
      %s26 = ssub.s32 %s20, 2
      %s33 = sadd.s32 1, %s28
      %p34 = scmp.ge.s32.totalorder %s33, 1
      %s35 = scalar_select %p34, 0, %s33
      %s36 = sadd.s32 1, %s27
      %s37 = scalar_select %p34, %s36, %s27
      %p38 = scmp.ge.s32.totalorder %s37, 2
      %s39 = scalar_select %p38, 0, %s37
      %s40 = ssub.s32 %s27, %s39
      %s41 = ssub.s32 %s28, %s35
      %s42 = sor.u32 %s40, %s41
      %p43 = scmp.eq.s32.totalorder %s42, 0
      %s45 = sadd.s32 %s44, 1
      %s46 = scalar_select %p43, %s44, %s45
      %p49 = pneg %p43
      %p50 = scmp.eq.s32.totalorder %s20, 1
      %p51 = por %p49, %p50
      %p52 = scmp.ne.s32.totalorder %s44, %s47
      %p53 = scmp.eq.s32.totalorder %s20, 0
      %p54 = por %p52, %p53
      %p55 = scmp.ne.s32.totalorder %s44, %s47
      %p56 = scmp.eq.s32.totalorder %s25, 1
      %p57 = por %p55, %p56
      %p58 = scmp.ne.s32.totalorder %s47, %s48
      %p59 = scmp.eq.s32.totalorder %s25, 0
      %p60 = por %p58, %p59
      %p61 = scmp.ne.s32.totalorder %s47, %s48
      %p62 = scmp.eq.s32.totalorder %s26, 1
      %p63 = por %p61, %p62
      %p65 = scmp.ne.s32.totalorder %s48, %s64
      %p66 = scmp.eq.s32.totalorder %s26, 0
      %p67 = por %p65, %p66
      %s69 = sadd.s32 %s68, 1
      %p72 = scmp.eq.s32.totalorder %s20, 1
      %p73 = scmp.ne.s32.totalorder %s68, %s70
      %p74 = scmp.eq.s32.totalorder %s20, 0
      %p75 = por %p73, %p74
      %p76 = scmp.ne.s32.totalorder %s68, %s70
      %p77 = scmp.eq.s32.totalorder %s25, 1
      %p78 = por %p76, %p77
      %p79 = scmp.ne.s32.totalorder %s70, %s71
      %p80 = scmp.eq.s32.totalorder %s25, 0
      %p81 = por %p79, %p80
      %p82 = scmp.ne.s32.totalorder %s70, %s71
      %p83 = scmp.eq.s32.totalorder %s26, 1
      %p84 = por %p82, %p83
      %p86 = scmp.ne.s32.totalorder %s71, %s85
      %p87 = scmp.eq.s32.totalorder %s26, 0
      %p88 = por %p86, %p87
      %s89 = ssub.s32 %s27, %s39
      %p90 = scmp.eq.s32.totalorder %s89, 0
      %s92 = sadd.s32 %s91, 1
      %s93 = scalar_select %p90, %s91, %s92
      %p96 = pneg %p90
      %p97 = scmp.eq.s32.totalorder %s20, 1
      %p98 = por %p96, %p97
      %p99 = scmp.ne.s32.totalorder %s91, %s94
      %p100 = scmp.eq.s32.totalorder %s20, 0
      %p101 = por %p99, %p100
      %p102 = scmp.ne.s32.totalorder %s91, %s94
      %p103 = scmp.eq.s32.totalorder %s25, 1
      %p104 = por %p102, %p103
      %p105 = scmp.ne.s32.totalorder %s94, %s95
      %p106 = scmp.eq.s32.totalorder %s25, 0
      %p107 = por %p105, %p106
      %p108 = scmp.ne.s32.totalorder %s94, %s95
      %p109 = scmp.eq.s32.totalorder %s26, 1
      %p110 = por %p108, %p109
      %p112 = scmp.ne.s32.totalorder %s95, %s111
      %p113 = scmp.eq.s32.totalorder %s26, 0
      %p114 = por %p112, %p113
      %s116 = sadd.s32 %s115, 1
      %p119 = scmp.eq.s32.totalorder %s20, 1
      %p120 = scmp.ne.s32.totalorder %s115, %s117
      %p121 = scmp.eq.s32.totalorder %s20, 0
      %p122 = por %p120, %p121
      %p123 = scmp.ne.s32.totalorder %s115, %s117
      %p124 = scmp.eq.s32.totalorder %s25, 1
      %p125 = por %p123, %p124
      %p126 = scmp.ne.s32.totalorder %s117, %s118
      %p127 = scmp.eq.s32.totalorder %s25, 0
      %p128 = por %p126, %p127
      %p129 = scmp.ne.s32.totalorder %s117, %s118
      %p130 = scmp.eq.s32.totalorder %s26, 1
      %p131 = por %p129, %p130
      %p133 = scmp.ne.s32.totalorder %s118, %s132
      %p134 = scmp.eq.s32.totalorder %s26, 0
      %p135 = por %p133, %p134
      %s137 = sadd.s32 %s136, 1
      %p140 = scmp.eq.s32.totalorder %s20, 1
      %p141 = scmp.ne.s32.totalorder %s136, %s138
      %p142 = scmp.eq.s32.totalorder %s20, 0
      %p143 = por %p141, %p142
      %p144 = scmp.ne.s32.totalorder %s136, %s138
      %p145 = scmp.eq.s32.totalorder %s25, 1
      %p146 = por %p144, %p145
      %p147 = scmp.ne.s32.totalorder %s138, %s139
      %p148 = scmp.eq.s32.totalorder %s25, 0
      %p149 = por %p147, %p148
      %p150 = scmp.ne.s32.totalorder %s138, %s139
      %p151 = scmp.eq.s32.totalorder %s26, 1
      %p152 = por %p150, %p151
      %p154 = scmp.ne.s32.totalorder %s139, %s153
      %p155 = scmp.eq.s32.totalorder %s26, 0
      %p156 = por %p154, %p155
      %s158 = sadd.s32 %s157, 1
      %p161 = scmp.eq.s32.totalorder %s20, 1
      %p162 = scmp.ne.s32.totalorder %s157, %s159
      %p163 = scmp.eq.s32.totalorder %s20, 0
      %p164 = por %p162, %p163
      %p165 = scmp.ne.s32.totalorder %s157, %s159
      %p166 = scmp.eq.s32.totalorder %s25, 1
      %p167 = por %p165, %p166
      %p168 = scmp.ne.s32.totalorder %s159, %s160
      %p169 = scmp.eq.s32.totalorder %s25, 0
      %p170 = por %p168, %p169
      %p171 = scmp.ne.s32.totalorder %s159, %s160
      %p172 = scmp.eq.s32.totalorder %s26, 1
      %p173 = por %p171, %p172
      %p175 = scmp.ne.s32.totalorder %s160, %s174
      %p176 = scmp.eq.s32.totalorder %s26, 0
      %p177 = por %p175, %p176
      %s178 = ssub.s32 %s27, %s39
      %p179 = scmp.eq.s32.totalorder %s178, 0
      %s181 = sadd.s32 %s180, 1
      %s182 = scalar_select %p179, %s180, %s181
      %p185 = pneg %p179
      %p186 = scmp.eq.s32.totalorder %s20, 1
      %p187 = por %p185, %p186
      %p188 = scmp.ne.s32.totalorder %s180, %s183
      %p189 = scmp.eq.s32.totalorder %s20, 0
      %p190 = por %p188, %p189
      %p191 = scmp.ne.s32.totalorder %s180, %s183
      %p192 = scmp.eq.s32.totalorder %s25, 1
      %p193 = por %p191, %p192
      %p194 = scmp.ne.s32.totalorder %s183, %s184
      %p195 = scmp.eq.s32.totalorder %s25, 0
      %p196 = por %p194, %p195
      %p197 = scmp.ne.s32.totalorder %s183, %s184
      %p198 = scmp.eq.s32.totalorder %s26, 1
      %p199 = por %p197, %p198
      %p201 = scmp.ne.s32.totalorder %s184, %s200
      %p202 = scmp.eq.s32.totalorder %s26, 0
      %p203 = por %p201, %p202
      %p204 = scmp.le.s32.totalorder 1, %s20
      %p205 = scmp.lt.s32.totalorder %s20, 3
      %p206 = pnand %p204, %p205
      %p207 = pneg %p206
      // Predicated region
      $region9: #{tpu_custom_call.1} parent=5 // pred_check
        _
      $region10: #{tpu_custom_call.1} parent=5 // pred_check_branch
        %209 = sbr.rel (%p206) target = $region12
      $region11: #{tpu_custom_call.1} parent=5 // pred_region
        %s210 = ssub.s32 %s20, 1
        // Predicated region
        $region13: #{tpu_custom_call.1} parent=11 // pred_check
          %p211 = pneg %p81
        $region14: #{tpu_custom_call.1} parent=11 // pred_check_branch
          %213 = sbr.rel (%p211) target = $region16
        $region15: #{tpu_custom_call.1} parent=11 // pred_region
          %215 = vsyncadd [#allocation7], 0
          %s216 = sshll.u32 %s1, 4
          %s217 = int_to_ptr.hbm [resolvable:$true] %s216
          %s218 = sshll.u32 [#allocation6], 4
          %s219 = int_to_ptr.vmem [resolvable:$true] %s218
          %224 = dma.hbm_to_vmem [thread:$0]  %s217, 2048, %s219, [#allocation7], 64, 64, 4
        $region16: #{tpu_custom_call.1} parent=11 // pred_fallthru
          _
        // Predicated region
        $region17: #{tpu_custom_call.1} parent=11 // pred_check
          %p225 = pneg %p128
        $region18: #{tpu_custom_call.1} parent=11 // pred_check_branch
          %227 = sbr.rel (%p225) target = $region20
        $region19: #{tpu_custom_call.1} parent=11 // pred_region
          %229 = vsyncadd [#allocation7], 0
          %s230 = sshll.u32 %s3, 4
          %s231 = int_to_ptr.hbm [resolvable:$true] %s230
          %s232 = sshll.u32 [#allocation9], 4
          %s233 = int_to_ptr.vmem [resolvable:$true] %s232
          %238 = dma.hbm_to_vmem [thread:$0]  %s231, 2048, %s233, [#allocation7], 128, 128, 8
        $region20: #{tpu_custom_call.1} parent=11 // pred_fallthru
          _
        // Predicated region
        $region21: #{tpu_custom_call.1} parent=11 // pred_check
          %p239 = pneg %p149
        $region22: #{tpu_custom_call.1} parent=11 // pred_check_branch
          %241 = sbr.rel (%p239) target = $region24
        $region23: #{tpu_custom_call.1} parent=11 // pred_region
          %243 = vsyncadd [#allocation11], 0
          %s244 = sshll.u32 %s4, 4
          %s245 = int_to_ptr.hbm [resolvable:$true] %s244
          %s246 = sshll.u32 [#allocation10], 4
          %s247 = int_to_ptr.vmem [resolvable:$true] %s246
          %252 = dma.hbm_to_vmem [thread:$0]  %s245, 2048, %s247, [#allocation11], 128, 128, 8
        $region24: #{tpu_custom_call.1} parent=11 // pred_fallthru
          _
        // Predicated region
        $region25: #{tpu_custom_call.1} parent=11 // pred_check
          %p253 = pneg %p170
        $region26: #{tpu_custom_call.1} parent=11 // pred_check_branch
          %255 = sbr.rel (%p253) target = $region28
        $region27: #{tpu_custom_call.1} parent=11 // pred_region
          _
        $region28: #{tpu_custom_call.1} parent=11 // pred_fallthru
          _
      $region12: #{tpu_custom_call.1} parent=5 // pred_fallthru
        _
      %p256 = scmp.lt.s32.totalorder %s20, 2
      // Predicated region
      $region29: #{tpu_custom_call.1} parent=5 // pred_check
        %p257 = pneg %p256
      $region30: #{tpu_custom_call.1} parent=5 // pred_check_branch
        %259 = sbr.rel (%p257) target = $region32
      $region31: #{tpu_custom_call.1} parent=5 // pred_region
        // Predicated region
        $region33: #{tpu_custom_call.1} parent=31 // pred_check
          %p260 = pneg %p54
        $region34: #{tpu_custom_call.1} parent=31 // pred_check_branch
          %262 = sbr.rel (%p260) target = $region36
        $region35: #{tpu_custom_call.1} parent=31 // pred_region
          %s263 = sand.u32 %s20, 1
          %s264 = scalar_lea.sflag [#allocation4], %s263
          %s265 = sand.u32 %s44, 1
          %s266 = smul.addr %s265, 64
          %s267 = scalar_lea.vmem [#allocation3], %s266
          %s268 = smul.u32 4, %s27
          %s269 = smul.u32 2, %s28
          %271 = vsyncadd %s264, 0
          %s272 = smul.addr %s268, 2
          %s273 = sadd.s32 %s269, %s272
          %s274 = smul.addr %s273, 8
          %s275 = scalar_lea.hbm %s0, %s274
          %s276 = sshll.u32 %s275, 4
          %s277 = int_to_ptr.hbm [resolvable:$true] %s276
          %s278 = sshll.u32 %s267, 4
          %s279 = int_to_ptr.vmem [resolvable:$true] %s278
          %284 = dma.hbm_to_vmem [thread:$0]  %s277, 1024, %s279, %s264, 256, 256, 16
        $region36: #{tpu_custom_call.1} parent=31 // pred_fallthru
          _
        // Predicated region
        $region37: #{tpu_custom_call.1} parent=31 // pred_check
          %p285 = pneg %p101
        $region38: #{tpu_custom_call.1} parent=31 // pred_check_branch
          %287 = sbr.rel (%p285) target = $region40
        $region39: #{tpu_custom_call.1} parent=31 // pred_region
          %s288 = sand.u32 %s20, 1
          %s289 = scalar_lea.sflag [#allocation4], %s288
          %s290 = sand.u32 %s91, 1
          %s291 = smul.addr %s290, 64
          %s292 = scalar_lea.vmem [#allocation8], %s291
          %s293 = smul.u32 16, %s27
          %295 = vsyncadd %s289, 0
          %s296 = smul.addr %s293, 4
          %s297 = scalar_lea.hbm %s2, %s296
          %s298 = sshll.u32 %s297, 4
          %s299 = int_to_ptr.hbm [resolvable:$true] %s298
          %s300 = sshll.u32 %s292, 4
          %s301 = int_to_ptr.vmem [resolvable:$true] %s300
          %306 = dma.hbm_to_vmem [thread:$0]  %s299, 1024, %s301, %s289, 64, 64, 4
        $region40: #{tpu_custom_call.1} parent=31 // pred_fallthru
          _
      $region32: #{tpu_custom_call.1} parent=5 // pred_fallthru
        _
      %p307 = scmp.le.s32.totalorder 1, %s20
      %p308 = scmp.lt.s32.totalorder %s20, 3
      %p309 = pnand %p307, %p308
      %p310 = pneg %p309
      // Predicated region
      $region41: #{tpu_custom_call.1} parent=5 // pred_check
        _
      $region42: #{tpu_custom_call.1} parent=5 // pred_check_branch
        %312 = sbr.rel (%p309) target = $region44
      $region43: #{tpu_custom_call.1} parent=5 // pred_region
        %s313 = ssub.s32 %s20, 1
        %s314 = sand.u32 %s25, 1
        %s315 = scalar_lea.sflag [#allocation4], %s314
        %s316 = sand.u32 %s47, 1
        %s317 = smul.addr %s316, 64
        %s318 = scalar_lea.vmem [#allocation3], %s317
        // Predicated region
        $region45: #{tpu_custom_call.1} parent=43 // pred_check
          %p319 = pneg %p60
        $region46: #{tpu_custom_call.1} parent=43 // pred_check_branch
          %321 = sbr.rel (%p319) target = $region48
        $region47: #{tpu_custom_call.1} parent=43 // pred_region
          %323 = dma.done %s315, 1024
        $region48: #{tpu_custom_call.1} parent=43 // pred_fallthru
          _
        // Predicated region
        $region49: #{tpu_custom_call.1} parent=43 // pred_check
          %p324 = pneg %p81
        $region50: #{tpu_custom_call.1} parent=43 // pred_check_branch
          %326 = sbr.rel (%p324) target = $region52
        $region51: #{tpu_custom_call.1} parent=43 // pred_region
          %328 = dma.done [#allocation7], 2048
        $region52: #{tpu_custom_call.1} parent=43 // pred_fallthru
          _
        %s329 = sand.u32 %s25, 1
        %s330 = scalar_lea.sflag [#allocation4], %s329
        %s331 = sand.u32 %s94, 1
        %s332 = smul.addr %s331, 64
        %s333 = scalar_lea.vmem [#allocation8], %s332
        // Predicated region
        $region53: #{tpu_custom_call.1} parent=43 // pred_check
          %p334 = pneg %p107
        $region54: #{tpu_custom_call.1} parent=43 // pred_check_branch
          %336 = sbr.rel (%p334) target = $region56
        $region55: #{tpu_custom_call.1} parent=43 // pred_region
          %338 = dma.done %s330, 1024
        $region56: #{tpu_custom_call.1} parent=43 // pred_fallthru
          _
        // Predicated region
        $region57: #{tpu_custom_call.1} parent=43 // pred_check
          %p339 = pneg %p128
        $region58: #{tpu_custom_call.1} parent=43 // pred_check_branch
          %341 = sbr.rel (%p339) target = $region60
        $region59: #{tpu_custom_call.1} parent=43 // pred_region
          %343 = dma.done [#allocation7], 2048
        $region60: #{tpu_custom_call.1} parent=43 // pred_fallthru
          _
        // Predicated region
        $region61: #{tpu_custom_call.1} parent=43 // pred_check
          %p344 = pneg %p149
        $region62: #{tpu_custom_call.1} parent=43 // pred_check_branch
          %346 = sbr.rel (%p344) target = $region64
        $region63: #{tpu_custom_call.1} parent=43 // pred_region
          %348 = dma.done [#allocation11], 2048
        $region64: #{tpu_custom_call.1} parent=43 // pred_fallthru
          _
        %s349 = sand.u32 %s25, 1
        %s350 = scalar_lea.sflag [#allocation4], %s349
        %s351 = sand.u32 %s47, 1
        %s352 = smul.addr %s351, 64
        %s353 = scalar_lea.vmem [#allocation3], %s352
        %p354 = pneg %p60
        %p355 = pneg %p57
        %p356 = pneg %p81
        %p357 = pneg %p78
        %s358 = sand.u32 %s25, 1
        %s359 = scalar_lea.sflag [#allocation4], %s358
        %s360 = sand.u32 %s94, 1
        %s361 = smul.addr %s360, 64
        %s362 = scalar_lea.vmem [#allocation8], %s361
        %p363 = pneg %p107
        %p364 = pneg %p104
        %p365 = pneg %p128
        %p366 = pneg %p125
        %p367 = pneg %p149
        %p368 = pneg %p146
        %p369 = pneg %p170
        %p370 = pneg %p167
        %p371 = pneg %p196
        %p372 = pneg %p193
        %s373 = sand.u32 %s183, 1
        %s374 = scalar_lea.sflag [#allocation5], %s373
        %s375 = sand.u32 %s183, 1
        %s376 = smul.addr %s375, 128
        %s377 = scalar_lea.vmem [#allocation12], %s376
        %s378 = smul.u32 4, %s29
        %s379 = smul.u32 2, %s30
        %s380 = smul.u32 16, %s29
        %s381 = smul.u32 16, %s29
        %p382 = scmp.eq.s32.totalorder %s30, 0
        // Predicated region
        $region65: #{tpu_custom_call.1} parent=43 // pred_check
          %p383 = pneg %p382
        $region66: #{tpu_custom_call.1} parent=43 // pred_check_branch
          %385 = sbr.rel (%p383) target = $region68
        $region67: #{tpu_custom_call.1} parent=43 // pred_region
          %386 = vst [vmem:[#allocation2] sm:$0xff] 0.0
          %387 = vst [vmem:[#allocation2 + $0x8] sm:$0xff] 0.0
          %388 = vst [vmem:[#allocation2 + $0x10] sm:$0xff] 0.0
          %389 = vst [vmem:[#allocation2 + $0x18] sm:$0xff] 0.0
          %390 = vst [vmem:[#allocation2 + $0x20] sm:$0xff] 0.0
          %391 = vst [vmem:[#allocation2 + $0x28] sm:$0xff] 0.0
          %392 = vst [vmem:[#allocation2 + $0x30] sm:$0xff] 0.0
          %393 = vst [vmem:[#allocation2 + $0x38] sm:$0xff] 0.0
          %394 = vst [vmem:[#allocation2 + $0x40] sm:$0xff] 0.0
          %395 = vst [vmem:[#allocation2 + $0x48] sm:$0xff] 0.0
          %396 = vst [vmem:[#allocation2 + $0x50] sm:$0xff] 0.0
          %397 = vst [vmem:[#allocation2 + $0x58] sm:$0xff] 0.0
          %398 = vst [vmem:[#allocation2 + $0x60] sm:$0xff] 0.0
          %399 = vst [vmem:[#allocation2 + $0x68] sm:$0xff] 0.0
          %400 = vst [vmem:[#allocation2 + $0x70] sm:$0xff] 0.0
          %401 = vst [vmem:[#allocation2 + $0x78] sm:$0xff] 0.0
        $region68: #{tpu_custom_call.1} parent=43 // pred_fallthru
          _
        %v402 = vld [vmem:[%s318] sm:$0xff]
        %v403 = vld [vmem:[%s318 + $0x8] sm:$0xff]
        %v404 = vld [vmem:[%s318 + $0x10] sm:$0xff]
        %v405 = vld [vmem:[%s318 + $0x18] sm:$0xff]
        %v406 = vld [vmem:[%s318 + $0x20] sm:$0xff]
        %v407 = vld [vmem:[%s318 + $0x28] sm:$0xff]
        %v408 = vld [vmem:[%s318 + $0x30] sm:$0xff]
        %v409 = vld [vmem:[%s318 + $0x38] sm:$0xff]
        %v410 = vunpack.c.0.s8 %v402
        %v411 = vunpack.c.0.s8 %v403
        %v412 = vunpack.c.1.s8 %v402
        %v413 = vunpack.c.1.s8 %v403
        %v414 = vunpack.c.2.s8 %v402
        %v415 = vunpack.c.2.s8 %v403
        %v416 = vunpack.c.3.s8 %v402
        %v417 = vunpack.c.3.s8 %v403
        %v418 = vunpack.c.0.s8 %v404
        %v419 = vunpack.c.0.s8 %v405
        %v420 = vunpack.c.1.s8 %v404
        %v421 = vunpack.c.1.s8 %v405
        %v422 = vunpack.c.2.s8 %v404
        %v423 = vunpack.c.2.s8 %v405
        %v424 = vunpack.c.3.s8 %v404
        %v425 = vunpack.c.3.s8 %v405
        %v426 = vunpack.c.0.s8 %v406
        %v427 = vunpack.c.0.s8 %v407
        %v428 = vunpack.c.1.s8 %v406
        %v429 = vunpack.c.1.s8 %v407
        %v430 = vunpack.c.2.s8 %v406
        %v431 = vunpack.c.2.s8 %v407
        %v432 = vunpack.c.3.s8 %v406
        %v433 = vunpack.c.3.s8 %v407
        %v434 = vunpack.c.0.s8 %v408
        %v435 = vunpack.c.0.s8 %v409
        %v436 = vunpack.c.1.s8 %v408
        %v437 = vunpack.c.1.s8 %v409
        %v438 = vunpack.c.2.s8 %v408
        %v439 = vunpack.c.2.s8 %v409
        %v440 = vunpack.c.3.s8 %v408
        %v441 = vunpack.c.3.s8 %v409
        %v442 = vcvt.s32.f32 %v410
        %v443 = vcvt.s32.f32 %v411
        %v444 = vcvt.s32.f32 %v412
        %v445 = vcvt.s32.f32 %v413
        %v446 = vcvt.s32.f32 %v414
        %v447 = vcvt.s32.f32 %v415
        %v448 = vcvt.s32.f32 %v416
        %v449 = vcvt.s32.f32 %v417
        %v450 = vcvt.s32.f32 %v418
        %v451 = vcvt.s32.f32 %v419
        %v452 = vcvt.s32.f32 %v420
        %v453 = vcvt.s32.f32 %v421
        %v454 = vcvt.s32.f32 %v422
        %v455 = vcvt.s32.f32 %v423
        %v456 = vcvt.s32.f32 %v424
        %v457 = vcvt.s32.f32 %v425
        %v458 = vcvt.s32.f32 %v426
        %v459 = vcvt.s32.f32 %v427
        %v460 = vcvt.s32.f32 %v428
        %v461 = vcvt.s32.f32 %v429
        %v462 = vcvt.s32.f32 %v430
        %v463 = vcvt.s32.f32 %v431
        %v464 = vcvt.s32.f32 %v432
        %v465 = vcvt.s32.f32 %v433
        %v466 = vcvt.s32.f32 %v434
        %v467 = vcvt.s32.f32 %v435
        %v468 = vcvt.s32.f32 %v436
        %v469 = vcvt.s32.f32 %v437
        %v470 = vcvt.s32.f32 %v438
        %v471 = vcvt.s32.f32 %v439
        %v472 = vcvt.s32.f32 %v440
        %v473 = vcvt.s32.f32 %v441
        %v474 = vpack.c.bf16 %v444, %v442
        %v475 = vpack.c.bf16 %v445, %v443
        %v476 = vpack.c.bf16 %v448, %v446
        %v477 = vpack.c.bf16 %v449, %v447
        %v478 = vpack.c.bf16 %v452, %v450
        %v479 = vpack.c.bf16 %v453, %v451
        %v480 = vpack.c.bf16 %v456, %v454
        %v481 = vpack.c.bf16 %v457, %v455
        %v482 = vpack.c.bf16 %v460, %v458
        %v483 = vpack.c.bf16 %v461, %v459
        %v484 = vpack.c.bf16 %v464, %v462
        %v485 = vpack.c.bf16 %v465, %v463
        %v486 = vpack.c.bf16 %v468, %v466
        %v487 = vpack.c.bf16 %v469, %v467
        %v488 = vpack.c.bf16 %v472, %v470
        %v489 = vpack.c.bf16 %v473, %v471
        %s490 = smul.u32 %s30, 256
        %s491 = sshra.s32 %s490, 3
        %s492 = sand.u32 %s490, 7
        %s493 = smul.addr %s491, 4
        %s494 = scalar_lea.vmem [#allocation6], %s493
        %v495 = vld [vmem:[%s494] sm:$0xf]
        %v496 = vld [vmem:[%s494 + $0x4] sm:$0xf]
        %v497 = vld [vmem:[%s494 + $0x8] sm:$0xf]
        %v498 = vld [vmem:[%s494 + $0xc] sm:$0xf]
        %v499 = vld [vmem:[%s494 + $0x10] sm:$0xf]
        %v500 = vld [vmem:[%s494 + $0x14] sm:$0xf]
        %v501 = vld [vmem:[%s494 + $0x18] sm:$0xf]
        %v502 = vld [vmem:[%s494 + $0x1c] sm:$0xf]
        %v503 = vld [vmem:[%s494 + $0x20] sm:$0xf]
        %v504 = vld [vmem:[%s494 + $0x24] sm:$0xf]
        %v505 = vld [vmem:[%s494 + $0x28] sm:$0xf]
        %v506 = vld [vmem:[%s494 + $0x2c] sm:$0xf]
        %v507 = vld [vmem:[%s494 + $0x30] sm:$0xf]
        %v508 = vld [vmem:[%s494 + $0x34] sm:$0xf]
        %v509 = vld [vmem:[%s494 + $0x38] sm:$0xf]
        %v510 = vld [vmem:[%s494 + $0x3c] sm:$0xf]
        %v511 = vld [vmem:[%s494 + $0x40] sm:$0xf]
        %v512 = vld [vmem:[%s494 + $0x44] sm:$0xf]
        %v513 = vld [vmem:[%s494 + $0x48] sm:$0xf]
        %v514 = vld [vmem:[%s494 + $0x4c] sm:$0xf]
        %v515 = vld [vmem:[%s494 + $0x50] sm:$0xf]
        %v516 = vld [vmem:[%s494 + $0x54] sm:$0xf]
        %v517 = vld [vmem:[%s494 + $0x58] sm:$0xf]
        %v518 = vld [vmem:[%s494 + $0x5c] sm:$0xf]
        %v519 = vld [vmem:[%s494 + $0x60] sm:$0xf]
        %v520 = vld [vmem:[%s494 + $0x64] sm:$0xf]
        %v521 = vld [vmem:[%s494 + $0x68] sm:$0xf]
        %v522 = vld [vmem:[%s494 + $0x6c] sm:$0xf]
        %v523 = vld [vmem:[%s494 + $0x70] sm:$0xf]
        %v524 = vld [vmem:[%s494 + $0x74] sm:$0xf]
        %v525 = vld [vmem:[%s494 + $0x78] sm:$0xf]
        %v526 = vld [vmem:[%s494 + $0x7c] sm:$0xf]
        %v527 = vld [vmem:[#allocation2] sm:$0xff]
        %v528 = vld [vmem:[#allocation2 + $0x8] sm:$0xff]
        %v529 = vld [vmem:[#allocation2 + $0x10] sm:$0xff]
        %v530 = vld [vmem:[#allocation2 + $0x18] sm:$0xff]
        %v531 = vld [vmem:[#allocation2 + $0x20] sm:$0xff]
        %v532 = vld [vmem:[#allocation2 + $0x28] sm:$0xff]
        %v533 = vld [vmem:[#allocation2 + $0x30] sm:$0xff]
        %v534 = vld [vmem:[#allocation2 + $0x38] sm:$0xff]
        %v535 = vld [vmem:[#allocation2 + $0x40] sm:$0xff]
        %v536 = vld [vmem:[#allocation2 + $0x48] sm:$0xff]
        %v537 = vld [vmem:[#allocation2 + $0x50] sm:$0xff]
        %v538 = vld [vmem:[#allocation2 + $0x58] sm:$0xff]
        %v539 = vld [vmem:[#allocation2 + $0x60] sm:$0xff]
        %v540 = vld [vmem:[#allocation2 + $0x68] sm:$0xff]
        %v541 = vld [vmem:[#allocation2 + $0x70] sm:$0xff]
        %v542 = vld [vmem:[#allocation2 + $0x78] sm:$0xff]
        %v575 = vunpack.c.l.b16 %v495
        %v576 = vunpack.c.l.b16 %v496
        %v577 = vunpack.c.l.b16 %v497
        %v578 = vunpack.c.l.b16 %v498
        %v579 = vunpack.c.l.b16 %v499
        %v580 = vunpack.c.l.b16 %v500
        %v581 = vunpack.c.l.b16 %v501
        %v582 = vunpack.c.l.b16 %v502
        %v583 = vunpack.c.l.b16 %v503
        %v584 = vunpack.c.l.b16 %v504
        %v585 = vunpack.c.l.b16 %v505
        %v586 = vunpack.c.l.b16 %v506
        %v587 = vunpack.c.l.b16 %v507
        %v588 = vunpack.c.l.b16 %v508
        %v589 = vunpack.c.l.b16 %v509
        %v590 = vunpack.c.l.b16 %v510
        %v591 = vunpack.c.l.b16 %v511
        %v592 = vunpack.c.l.b16 %v512
        %v593 = vunpack.c.l.b16 %v513
        %v594 = vunpack.c.l.b16 %v514
        %v595 = vunpack.c.l.b16 %v515
        %v596 = vunpack.c.l.b16 %v516
        %v597 = vunpack.c.l.b16 %v517
        %v598 = vunpack.c.l.b16 %v518
        %v599 = vunpack.c.l.b16 %v519
        %v600 = vunpack.c.l.b16 %v520
        %v601 = vunpack.c.l.b16 %v521
        %v602 = vunpack.c.l.b16 %v522
        %v603 = vunpack.c.l.b16 %v523
        %v604 = vunpack.c.l.b16 %v524
        %v605 = vunpack.c.l.b16 %v525
        %v606 = vunpack.c.l.b16 %v526
        %v607 = vpack.c.b16 %v576, %v575
        %v608 = vpack.c.b16 %v578, %v577
        %v609 = vpack.c.b16 %v580, %v579
        %v610 = vpack.c.b16 %v582, %v581
        %v611 = vpack.c.b16 %v584, %v583
        %v612 = vpack.c.b16 %v586, %v585
        %v613 = vpack.c.b16 %v588, %v587
        %v614 = vpack.c.b16 %v590, %v589
        %v615 = vpack.c.b16 %v592, %v591
        %v616 = vpack.c.b16 %v594, %v593
        %v617 = vpack.c.b16 %v596, %v595
        %v618 = vpack.c.b16 %v598, %v597
        %v619 = vpack.c.b16 %v600, %v599
        %v620 = vpack.c.b16 %v602, %v601
        %v621 = vpack.c.b16 %v604, %v603
        %v622 = vpack.c.b16 %v606, %v605
        %639 = vmatpush.bf16.msra.mxu0 %v614
        %640 = vmatpush.bf16.msra.mxu0 %v613
        %641 = vmatpush.bf16.msra.mxu0 %v612
        %642 = vmatpush.bf16.msra.mxu0 %v611
        %643 = vmatpush.bf16.msra.mxu0 %v610
        %644 = vmatpush.bf16.msra.mxu0 %v609
        %645 = vmatpush.bf16.msra.mxu0 %v608
        %646 = vmatpush.bf16.msra.mxu0 %v607
        %647 = vmatmul.bf16.gmra.mxu0 %v474
        %v648 = vpop.f32.mrf.mxu0
        %v649 = vadd.f32 0.0, %v648
        %v650 = vpop.f32.mrf.mxu0
        %v651 = vadd.f32 0.0, %v650
        %652 = vmatmul.bf16.gmra.mxu0 %v476
        %v653 = vpop.f32.mrf.mxu0
        %v654 = vadd.f32 0.0, %v653
        %v655 = vpop.f32.mrf.mxu0
        %v656 = vadd.f32 0.0, %v655
        %657 = vmatmul.bf16.gmra.mxu0 %v478
        %v658 = vpop.f32.mrf.mxu0
        %v659 = vadd.f32 0.0, %v658
        %v660 = vpop.f32.mrf.mxu0
        %v661 = vadd.f32 0.0, %v660
        %662 = vmatmul.bf16.gmra.mxu0 %v480
        %v663 = vpop.f32.mrf.mxu0
        %v664 = vadd.f32 0.0, %v663
        %v665 = vpop.f32.mrf.mxu0
        %v666 = vadd.f32 0.0, %v665
        %667 = vmatmul.bf16.gmra.mxu0 %v482
        %v668 = vpop.f32.mrf.mxu0
        %v669 = vadd.f32 0.0, %v668
        %v670 = vpop.f32.mrf.mxu0
        %v671 = vadd.f32 0.0, %v670
        %672 = vmatmul.bf16.gmra.mxu0 %v484
        %v673 = vpop.f32.mrf.mxu0
        %v674 = vadd.f32 0.0, %v673
        %v675 = vpop.f32.mrf.mxu0
        %v676 = vadd.f32 0.0, %v675
        %677 = vmatmul.bf16.gmra.mxu0 %v486
        %v678 = vpop.f32.mrf.mxu0
        %v679 = vadd.f32 0.0, %v678
        %v680 = vpop.f32.mrf.mxu0
        %v681 = vadd.f32 0.0, %v680
        %682 = vmatmul.bf16.gmra.mxu0 %v488
        %v683 = vpop.f32.mrf.mxu0
        %v684 = vadd.f32 0.0, %v683
        %v685 = vpop.f32.mrf.mxu0
        %v686 = vadd.f32 0.0, %v685
        %687 = vdwg.mxu0
        %688 = vmatpush.bf16.msra.mxu0 %v622
        %689 = vmatpush.bf16.msra.mxu0 %v621
        %690 = vmatpush.bf16.msra.mxu0 %v620
        %691 = vmatpush.bf16.msra.mxu0 %v619
        %692 = vmatpush.bf16.msra.mxu0 %v618
        %693 = vmatpush.bf16.msra.mxu0 %v617
        %694 = vmatpush.bf16.msra.mxu0 %v616
        %695 = vmatpush.bf16.msra.mxu0 %v615
        %696 = vmatmul.bf16.gmra.mxu0 %v475
        %v697 = vpop.f32.mrf.mxu0
        %v698 = vadd.f32 %v649, %v697
        %v699 = vpop.f32.mrf.mxu0
        %v700 = vadd.f32 %v651, %v699
        %701 = vmatmul.bf16.gmra.mxu0 %v477
        %v702 = vpop.f32.mrf.mxu0
        %v703 = vadd.f32 %v654, %v702
        %v704 = vpop.f32.mrf.mxu0
        %v705 = vadd.f32 %v656, %v704
        %706 = vmatmul.bf16.gmra.mxu0 %v479
        %v707 = vpop.f32.mrf.mxu0
        %v708 = vadd.f32 %v659, %v707
        %v709 = vpop.f32.mrf.mxu0
        %v710 = vadd.f32 %v661, %v709
        %711 = vmatmul.bf16.gmra.mxu0 %v481
        %v712 = vpop.f32.mrf.mxu0
        %v713 = vadd.f32 %v664, %v712
        %v714 = vpop.f32.mrf.mxu0
        %v715 = vadd.f32 %v666, %v714
        %716 = vmatmul.bf16.gmra.mxu0 %v483
        %v717 = vpop.f32.mrf.mxu0
        %v718 = vadd.f32 %v669, %v717
        %v719 = vpop.f32.mrf.mxu0
        %v720 = vadd.f32 %v671, %v719
        %721 = vmatmul.bf16.gmra.mxu0 %v485
        %v722 = vpop.f32.mrf.mxu0
        %v723 = vadd.f32 %v674, %v722
        %v724 = vpop.f32.mrf.mxu0
        %v725 = vadd.f32 %v676, %v724
        %726 = vmatmul.bf16.gmra.mxu0 %v487
        %v727 = vpop.f32.mrf.mxu0
        %v728 = vadd.f32 %v679, %v727
        %v729 = vpop.f32.mrf.mxu0
        %v730 = vadd.f32 %v681, %v729
        %731 = vmatmul.bf16.gmra.mxu0 %v489
        %v732 = vpop.f32.mrf.mxu0
        %v733 = vadd.f32 %v684, %v732
        %v734 = vpop.f32.mrf.mxu0
        %v735 = vadd.f32 %v686, %v734
        %736 = vdwg.mxu0
        %v737 = vadd.f32 %v527, %v698
        %v738 = vadd.f32 %v528, %v700
        %v739 = vadd.f32 %v529, %v703
        %v740 = vadd.f32 %v530, %v705
        %v741 = vadd.f32 %v531, %v708
        %v742 = vadd.f32 %v532, %v710
        %v743 = vadd.f32 %v533, %v713
        %v744 = vadd.f32 %v534, %v715
        %v745 = vadd.f32 %v535, %v718
        %v746 = vadd.f32 %v536, %v720
        %v747 = vadd.f32 %v537, %v723
        %v748 = vadd.f32 %v538, %v725
        %v749 = vadd.f32 %v539, %v728
        %v750 = vadd.f32 %v540, %v730
        %v751 = vadd.f32 %v541, %v733
        %v752 = vadd.f32 %v542, %v735
        %753 = vst [vmem:[#allocation2] sm:$0xff] %v737
        %754 = vst [vmem:[#allocation2 + $0x8] sm:$0xff] %v738
        %755 = vst [vmem:[#allocation2 + $0x10] sm:$0xff] %v739
        %756 = vst [vmem:[#allocation2 + $0x18] sm:$0xff] %v740
        %757 = vst [vmem:[#allocation2 + $0x20] sm:$0xff] %v741
        %758 = vst [vmem:[#allocation2 + $0x28] sm:$0xff] %v742
        %759 = vst [vmem:[#allocation2 + $0x30] sm:$0xff] %v743
        %760 = vst [vmem:[#allocation2 + $0x38] sm:$0xff] %v744
        %761 = vst [vmem:[#allocation2 + $0x40] sm:$0xff] %v745
        %762 = vst [vmem:[#allocation2 + $0x48] sm:$0xff] %v746
        %763 = vst [vmem:[#allocation2 + $0x50] sm:$0xff] %v747
        %764 = vst [vmem:[#allocation2 + $0x58] sm:$0xff] %v748
        %765 = vst [vmem:[#allocation2 + $0x60] sm:$0xff] %v749
        %766 = vst [vmem:[#allocation2 + $0x68] sm:$0xff] %v750
        %767 = vst [vmem:[#allocation2 + $0x70] sm:$0xff] %v751
        %768 = vst [vmem:[#allocation2 + $0x78] sm:$0xff] %v752
        // Predicated region
        $region69: #{tpu_custom_call.1} parent=43 // pred_check
          %p769 = pneg %p382
        $region70: #{tpu_custom_call.1} parent=43 // pred_check_branch
          %771 = sbr.rel (%p769) target = $region72
        $region71: #{tpu_custom_call.1} parent=43 // pred_region
          %v772 = vld [vmem:[#allocation2] sm:$0xff]
          %v773 = vld [vmem:[#allocation2 + $0x8] sm:$0xff]
          %v774 = vld [vmem:[#allocation2 + $0x10] sm:$0xff]
          %v775 = vld [vmem:[#allocation2 + $0x18] sm:$0xff]
          %v776 = vld [vmem:[#allocation2 + $0x20] sm:$0xff]
          %v777 = vld [vmem:[#allocation2 + $0x28] sm:$0xff]
          %v778 = vld [vmem:[#allocation2 + $0x30] sm:$0xff]
          %v779 = vld [vmem:[#allocation2 + $0x38] sm:$0xff]
          %v780 = vld [vmem:[#allocation2 + $0x40] sm:$0xff]
          %v781 = vld [vmem:[#allocation2 + $0x48] sm:$0xff]
          %v782 = vld [vmem:[#allocation2 + $0x50] sm:$0xff]
          %v783 = vld [vmem:[#allocation2 + $0x58] sm:$0xff]
          %v784 = vld [vmem:[#allocation2 + $0x60] sm:$0xff]
          %v785 = vld [vmem:[#allocation2 + $0x68] sm:$0xff]
          %v786 = vld [vmem:[#allocation2 + $0x70] sm:$0xff]
          %v787 = vld [vmem:[#allocation2 + $0x78] sm:$0xff]
          %v788 = vmax.f32 %v772, 1.0
          %v789 = vmax.f32 %v773, 1.0
          %v790 = vmax.f32 %v774, 1.0
          %v791 = vmax.f32 %v775, 1.0
          %v792 = vmax.f32 %v776, 1.0
          %v793 = vmax.f32 %v777, 1.0
          %v794 = vmax.f32 %v778, 1.0
          %v795 = vmax.f32 %v779, 1.0
          %v796 = vmax.f32 %v780, 1.0
          %v797 = vmax.f32 %v781, 1.0
          %v798 = vmax.f32 %v782, 1.0
          %v799 = vmax.f32 %v783, 1.0
          %v800 = vmax.f32 %v784, 1.0
          %v801 = vmax.f32 %v785, 1.0
          %v802 = vmax.f32 %v786, 1.0
          %v803 = vmax.f32 %v787, 1.0
          %v804 = vrcp.pop %v788
          %v805 = vmul.f32 %v788, %v804
          %v806 = vsub.f32 1.0, %v805
          %v807 = vmul.f32 %v804, %v806
          %v808 = vadd.f32 %v804, %v807
          %vm809 = vweird.f32 %v788
          %vm810 = vweird.f32 %v804
          %vm811 = vmor %vm809, %vm810
          %v812 = vsel %vm811, %v804, %v808
          %v813 = vand.u32 2147483647, %v788
          %vm814 = vcmp.eq.f32.partialorder %v813, 8.507059e+37
          %v815 = vand.u32 %v788, 2147483648
          %v816 = vor.u32 1.1754944e-38, %v815
          %v817 = vsel %vm814, %v816, %v812
          %v818 = vmul.f32 1.0, %v817
          %v819 = vrcp.pop %v789
          %v820 = vmul.f32 %v789, %v819
          %v821 = vsub.f32 1.0, %v820
          %v822 = vmul.f32 %v819, %v821
          %v823 = vadd.f32 %v819, %v822
          %vm824 = vweird.f32 %v789
          %vm825 = vweird.f32 %v819
          %vm826 = vmor %vm824, %vm825
          %v827 = vsel %vm826, %v819, %v823
          %v828 = vand.u32 2147483647, %v789
          %vm829 = vcmp.eq.f32.partialorder %v828, 8.507059e+37
          %v830 = vand.u32 %v789, 2147483648
          %v831 = vor.u32 1.1754944e-38, %v830
          %v832 = vsel %vm829, %v831, %v827
          %v833 = vmul.f32 1.0, %v832
          %v834 = vrcp.pop %v790
          %v835 = vmul.f32 %v790, %v834
          %v836 = vsub.f32 1.0, %v835
          %v837 = vmul.f32 %v834, %v836
          %v838 = vadd.f32 %v834, %v837
          %vm839 = vweird.f32 %v790
          %vm840 = vweird.f32 %v834
          %vm841 = vmor %vm839, %vm840
          %v842 = vsel %vm841, %v834, %v838
          %v843 = vand.u32 2147483647, %v790
          %vm844 = vcmp.eq.f32.partialorder %v843, 8.507059e+37
          %v845 = vand.u32 %v790, 2147483648
          %v846 = vor.u32 1.1754944e-38, %v845
          %v847 = vsel %vm844, %v846, %v842
          %v848 = vmul.f32 1.0, %v847
          %v849 = vrcp.pop %v791
          %v850 = vmul.f32 %v791, %v849
          %v851 = vsub.f32 1.0, %v850
          %v852 = vmul.f32 %v849, %v851
          %v853 = vadd.f32 %v849, %v852
          %vm854 = vweird.f32 %v791
          %vm855 = vweird.f32 %v849
          %vm856 = vmor %vm854, %vm855
          %v857 = vsel %vm856, %v849, %v853
          %v858 = vand.u32 2147483647, %v791
          %vm859 = vcmp.eq.f32.partialorder %v858, 8.507059e+37
          %v860 = vand.u32 %v791, 2147483648
          %v861 = vor.u32 1.1754944e-38, %v860
          %v862 = vsel %vm859, %v861, %v857
          %v863 = vmul.f32 1.0, %v862
          %v864 = vrcp.pop %v792
          %v865 = vmul.f32 %v792, %v864
          %v866 = vsub.f32 1.0, %v865
          %v867 = vmul.f32 %v864, %v866
          %v868 = vadd.f32 %v864, %v867
          %vm869 = vweird.f32 %v792
          %vm870 = vweird.f32 %v864
          %vm871 = vmor %vm869, %vm870
          %v872 = vsel %vm871, %v864, %v868
          %v873 = vand.u32 2147483647, %v792
          %vm874 = vcmp.eq.f32.partialorder %v873, 8.507059e+37
          %v875 = vand.u32 %v792, 2147483648
          %v876 = vor.u32 1.1754944e-38, %v875
          %v877 = vsel %vm874, %v876, %v872
          %v878 = vmul.f32 1.0, %v877
          %v879 = vrcp.pop %v793
          %v880 = vmul.f32 %v793, %v879
          %v881 = vsub.f32 1.0, %v880
          %v882 = vmul.f32 %v879, %v881
          %v883 = vadd.f32 %v879, %v882
          %vm884 = vweird.f32 %v793
          %vm885 = vweird.f32 %v879
          %vm886 = vmor %vm884, %vm885
          %v887 = vsel %vm886, %v879, %v883
          %v888 = vand.u32 2147483647, %v793
          %vm889 = vcmp.eq.f32.partialorder %v888, 8.507059e+37
          %v890 = vand.u32 %v793, 2147483648
          %v891 = vor.u32 1.1754944e-38, %v890
          %v892 = vsel %vm889, %v891, %v887
          %v893 = vmul.f32 1.0, %v892
          %v894 = vrcp.pop %v794
          %v895 = vmul.f32 %v794, %v894
          %v896 = vsub.f32 1.0, %v895
          %v897 = vmul.f32 %v894, %v896
          %v898 = vadd.f32 %v894, %v897
          %vm899 = vweird.f32 %v794
          %vm900 = vweird.f32 %v894
          %vm901 = vmor %vm899, %vm900
          %v902 = vsel %vm901, %v894, %v898
          %v903 = vand.u32 2147483647, %v794
          %vm904 = vcmp.eq.f32.partialorder %v903, 8.507059e+37
          %v905 = vand.u32 %v794, 2147483648
          %v906 = vor.u32 1.1754944e-38, %v905
          %v907 = vsel %vm904, %v906, %v902
          %v908 = vmul.f32 1.0, %v907
          %v909 = vrcp.pop %v795
          %v910 = vmul.f32 %v795, %v909
          %v911 = vsub.f32 1.0, %v910
          %v912 = vmul.f32 %v909, %v911
          %v913 = vadd.f32 %v909, %v912
          %vm914 = vweird.f32 %v795
          %vm915 = vweird.f32 %v909
          %vm916 = vmor %vm914, %vm915
          %v917 = vsel %vm916, %v909, %v913
          %v918 = vand.u32 2147483647, %v795
          %vm919 = vcmp.eq.f32.partialorder %v918, 8.507059e+37
          %v920 = vand.u32 %v795, 2147483648
          %v921 = vor.u32 1.1754944e-38, %v920
          %v922 = vsel %vm919, %v921, %v917
          %v923 = vmul.f32 1.0, %v922
          %v924 = vrcp.pop %v796
          %v925 = vmul.f32 %v796, %v924
          %v926 = vsub.f32 1.0, %v925
          %v927 = vmul.f32 %v924, %v926
          %v928 = vadd.f32 %v924, %v927
          %vm929 = vweird.f32 %v796
          %vm930 = vweird.f32 %v924
          %vm931 = vmor %vm929, %vm930
          %v932 = vsel %vm931, %v924, %v928
          %v933 = vand.u32 2147483647, %v796
          %vm934 = vcmp.eq.f32.partialorder %v933, 8.507059e+37
          %v935 = vand.u32 %v796, 2147483648
          %v936 = vor.u32 1.1754944e-38, %v935
          %v937 = vsel %vm934, %v936, %v932
          %v938 = vmul.f32 1.0, %v937
          %v939 = vrcp.pop %v797
          %v940 = vmul.f32 %v797, %v939
          %v941 = vsub.f32 1.0, %v940
          %v942 = vmul.f32 %v939, %v941
          %v943 = vadd.f32 %v939, %v942
          %vm944 = vweird.f32 %v797
          %vm945 = vweird.f32 %v939
          %vm946 = vmor %vm944, %vm945
          %v947 = vsel %vm946, %v939, %v943
          %v948 = vand.u32 2147483647, %v797
          %vm949 = vcmp.eq.f32.partialorder %v948, 8.507059e+37
          %v950 = vand.u32 %v797, 2147483648
          %v951 = vor.u32 1.1754944e-38, %v950
          %v952 = vsel %vm949, %v951, %v947
          %v953 = vmul.f32 1.0, %v952
          %v954 = vrcp.pop %v798
          %v955 = vmul.f32 %v798, %v954
          %v956 = vsub.f32 1.0, %v955
          %v957 = vmul.f32 %v954, %v956
          %v958 = vadd.f32 %v954, %v957
          %vm959 = vweird.f32 %v798
          %vm960 = vweird.f32 %v954
          %vm961 = vmor %vm959, %vm960
          %v962 = vsel %vm961, %v954, %v958
          %v963 = vand.u32 2147483647, %v798
          %vm964 = vcmp.eq.f32.partialorder %v963, 8.507059e+37
          %v965 = vand.u32 %v798, 2147483648
          %v966 = vor.u32 1.1754944e-38, %v965
          %v967 = vsel %vm964, %v966, %v962
          %v968 = vmul.f32 1.0, %v967
          %v969 = vrcp.pop %v799
          %v970 = vmul.f32 %v799, %v969
          %v971 = vsub.f32 1.0, %v970
          %v972 = vmul.f32 %v969, %v971
          %v973 = vadd.f32 %v969, %v972
          %vm974 = vweird.f32 %v799
          %vm975 = vweird.f32 %v969
          %vm976 = vmor %vm974, %vm975
          %v977 = vsel %vm976, %v969, %v973
          %v978 = vand.u32 2147483647, %v799
          %vm979 = vcmp.eq.f32.partialorder %v978, 8.507059e+37
          %v980 = vand.u32 %v799, 2147483648
          %v981 = vor.u32 1.1754944e-38, %v980
          %v982 = vsel %vm979, %v981, %v977
          %v983 = vmul.f32 1.0, %v982
          %v984 = vrcp.pop %v800
          %v985 = vmul.f32 %v800, %v984
          %v986 = vsub.f32 1.0, %v985
          %v987 = vmul.f32 %v984, %v986
          %v988 = vadd.f32 %v984, %v987
          %vm989 = vweird.f32 %v800
          %vm990 = vweird.f32 %v984
          %vm991 = vmor %vm989, %vm990
          %v992 = vsel %vm991, %v984, %v988
          %v993 = vand.u32 2147483647, %v800
          %vm994 = vcmp.eq.f32.partialorder %v993, 8.507059e+37
          %v995 = vand.u32 %v800, 2147483648
          %v996 = vor.u32 1.1754944e-38, %v995
          %v997 = vsel %vm994, %v996, %v992
          %v998 = vmul.f32 1.0, %v997
          %v999 = vrcp.pop %v801
          %v1000 = vmul.f32 %v801, %v999
          %v1001 = vsub.f32 1.0, %v1000
          %v1002 = vmul.f32 %v999, %v1001
          %v1003 = vadd.f32 %v999, %v1002
          %vm1004 = vweird.f32 %v801
          %vm1005 = vweird.f32 %v999
          %vm1006 = vmor %vm1004, %vm1005
          %v1007 = vsel %vm1006, %v999, %v1003
          %v1008 = vand.u32 2147483647, %v801
          %vm1009 = vcmp.eq.f32.partialorder %v1008, 8.507059e+37
          %v1010 = vand.u32 %v801, 2147483648
          %v1011 = vor.u32 1.1754944e-38, %v1010
          %v1012 = vsel %vm1009, %v1011, %v1007
          %v1013 = vmul.f32 1.0, %v1012
          %v1014 = vrcp.pop %v802
          %v1015 = vmul.f32 %v802, %v1014
          %v1016 = vsub.f32 1.0, %v1015
          %v1017 = vmul.f32 %v1014, %v1016
          %v1018 = vadd.f32 %v1014, %v1017
          %vm1019 = vweird.f32 %v802
          %vm1020 = vweird.f32 %v1014
          %vm1021 = vmor %vm1019, %vm1020
          %v1022 = vsel %vm1021, %v1014, %v1018
          %v1023 = vand.u32 2147483647, %v802
          %vm1024 = vcmp.eq.f32.partialorder %v1023, 8.507059e+37
          %v1025 = vand.u32 %v802, 2147483648
          %v1026 = vor.u32 1.1754944e-38, %v1025
          %v1027 = vsel %vm1024, %v1026, %v1022
          %v1028 = vmul.f32 1.0, %v1027
          %v1029 = vrcp.pop %v803
          %v1030 = vmul.f32 %v803, %v1029
          %v1031 = vsub.f32 1.0, %v1030
          %v1032 = vmul.f32 %v1029, %v1031
          %v1033 = vadd.f32 %v1029, %v1032
          %vm1034 = vweird.f32 %v803
          %vm1035 = vweird.f32 %v1029
          %vm1036 = vmor %vm1034, %vm1035
          %v1037 = vsel %vm1036, %v1029, %v1033
          %v1038 = vand.u32 2147483647, %v803
          %vm1039 = vcmp.eq.f32.partialorder %v1038, 8.507059e+37
          %v1040 = vand.u32 %v803, 2147483648
          %v1041 = vor.u32 1.1754944e-38, %v1040
          %v1042 = vsel %vm1039, %v1041, %v1037
          %v1043 = vmul.f32 1.0, %v1042
          %1045 = vset.pattern.permute.xlu0 0
          %1046 = vperm.xlu0 %1045, %v818
          %v1047 = vpop.permute.xlu0 %1046
          %1050 = vset.pattern.permute.xlu0 0
          %1051 = vperm.xlu0 %1050, %v833
          %v1052 = vpop.permute.xlu0 %1051
          %1055 = vset.pattern.permute.xlu0 0
          %1056 = vperm.xlu0 %1055, %v848
          %v1057 = vpop.permute.xlu0 %1056
          %1060 = vset.pattern.permute.xlu0 0
          %1061 = vperm.xlu0 %1060, %v863
          %v1062 = vpop.permute.xlu0 %1061
          %1065 = vset.pattern.permute.xlu0 0
          %1066 = vperm.xlu0 %1065, %v878
          %v1067 = vpop.permute.xlu0 %1066
          %1070 = vset.pattern.permute.xlu0 0
          %1071 = vperm.xlu0 %1070, %v893
          %v1072 = vpop.permute.xlu0 %1071
          %1075 = vset.pattern.permute.xlu0 0
          %1076 = vperm.xlu0 %1075, %v908
          %v1077 = vpop.permute.xlu0 %1076
          %1080 = vset.pattern.permute.xlu0 0
          %1081 = vperm.xlu0 %1080, %v923
          %v1082 = vpop.permute.xlu0 %1081
          %1085 = vset.pattern.permute.xlu0 0
          %1086 = vperm.xlu0 %1085, %v938
          %v1087 = vpop.permute.xlu0 %1086
          %1090 = vset.pattern.permute.xlu0 0
          %1091 = vperm.xlu0 %1090, %v953
          %v1092 = vpop.permute.xlu0 %1091
          %1095 = vset.pattern.permute.xlu0 0
          %1096 = vperm.xlu0 %1095, %v968
          %v1097 = vpop.permute.xlu0 %1096
          %1100 = vset.pattern.permute.xlu0 0
          %1101 = vperm.xlu0 %1100, %v983
          %v1102 = vpop.permute.xlu0 %1101
          %1105 = vset.pattern.permute.xlu0 0
          %1106 = vperm.xlu0 %1105, %v998
          %v1107 = vpop.permute.xlu0 %1106
          %1110 = vset.pattern.permute.xlu0 0
          %1111 = vperm.xlu0 %1110, %v1013
          %v1112 = vpop.permute.xlu0 %1111
          %1115 = vset.pattern.permute.xlu0 0
          %1116 = vperm.xlu0 %1115, %v1028
          %v1117 = vpop.permute.xlu0 %1116
          %1120 = vset.pattern.permute.xlu0 0
          %1121 = vperm.xlu0 %1120, %v1043
          %v1122 = vpop.permute.xlu0 %1121
          %v1124 = vmul.f32 %v772, %v1047
          %v1125 = vmul.f32 %v773, %v1052
          %v1126 = vmul.f32 %v774, %v1057
          %v1127 = vmul.f32 %v775, %v1062
          %v1128 = vmul.f32 %v776, %v1067
          %v1129 = vmul.f32 %v777, %v1072
          %v1130 = vmul.f32 %v778, %v1077
          %v1131 = vmul.f32 %v779, %v1082
          %v1132 = vmul.f32 %v780, %v1087
          %v1133 = vmul.f32 %v781, %v1092
          %v1134 = vmul.f32 %v782, %v1097
          %v1135 = vmul.f32 %v783, %v1102
          %v1136 = vmul.f32 %v784, %v1107
          %v1137 = vmul.f32 %v785, %v1112
          %v1138 = vmul.f32 %v786, %v1117
          %v1139 = vmul.f32 %v787, %v1122
          %v1140 = vld [vmem:[%s333] sm:$0xf]
          %v1141 = vld [vmem:[%s333 + $0x4] sm:$0xf]
          %v1142 = vld [vmem:[%s333 + $0x8] sm:$0xf]
          %v1143 = vld [vmem:[%s333 + $0xc] sm:$0xf]
          %v1144 = vld [vmem:[%s333 + $0x10] sm:$0xf]
          %v1145 = vld [vmem:[%s333 + $0x14] sm:$0xf]
          %v1146 = vld [vmem:[%s333 + $0x18] sm:$0xf]
          %v1147 = vld [vmem:[%s333 + $0x1c] sm:$0xf]
          %v1148 = vld [vmem:[%s333 + $0x20] sm:$0xf]
          %v1149 = vld [vmem:[%s333 + $0x24] sm:$0xf]
          %v1150 = vld [vmem:[%s333 + $0x28] sm:$0xf]
          %v1151 = vld [vmem:[%s333 + $0x2c] sm:$0xf]
          %v1152 = vld [vmem:[%s333 + $0x30] sm:$0xf]
          %v1153 = vld [vmem:[%s333 + $0x34] sm:$0xf]
          %v1154 = vld [vmem:[%s333 + $0x38] sm:$0xf]
          %v1155 = vld [vmem:[%s333 + $0x3c] sm:$0xf]
          %v1156 = vunpack.c.l.bf16 %v1140
          %v1157 = vunpack.c.l.bf16 %v1141
          %v1158 = vunpack.c.l.bf16 %v1142
          %v1159 = vunpack.c.l.bf16 %v1143
          %v1160 = vunpack.c.l.bf16 %v1144
          %v1161 = vunpack.c.l.bf16 %v1145
          %v1162 = vunpack.c.l.bf16 %v1146
          %v1163 = vunpack.c.l.bf16 %v1147
          %v1164 = vunpack.c.l.bf16 %v1148
          %v1165 = vunpack.c.l.bf16 %v1149
          %v1166 = vunpack.c.l.bf16 %v1150
          %v1167 = vunpack.c.l.bf16 %v1151
          %v1168 = vunpack.c.l.bf16 %v1152
          %v1169 = vunpack.c.l.bf16 %v1153
          %v1170 = vunpack.c.l.bf16 %v1154
          %v1171 = vunpack.c.l.bf16 %v1155
          %v1172 = vld [vmem:[#allocation9] sm:$0xff]
          %v1173 = vld [vmem:[#allocation9 + $0x8] sm:$0xff]
          %v1174 = vld [vmem:[#allocation9 + $0x10] sm:$0xff]
          %v1175 = vld [vmem:[#allocation9 + $0x18] sm:$0xff]
          %v1176 = vld [vmem:[#allocation9 + $0x20] sm:$0xff]
          %v1177 = vld [vmem:[#allocation9 + $0x28] sm:$0xff]
          %v1178 = vld [vmem:[#allocation9 + $0x30] sm:$0xff]
          %v1179 = vld [vmem:[#allocation9 + $0x38] sm:$0xff]
          %v1180 = vld [vmem:[#allocation9 + $0x40] sm:$0xff]
          %v1181 = vld [vmem:[#allocation9 + $0x48] sm:$0xff]
          %v1182 = vld [vmem:[#allocation9 + $0x50] sm:$0xff]
          %v1183 = vld [vmem:[#allocation9 + $0x58] sm:$0xff]
          %v1184 = vld [vmem:[#allocation9 + $0x60] sm:$0xff]
          %v1185 = vld [vmem:[#allocation9 + $0x68] sm:$0xff]
          %v1186 = vld [vmem:[#allocation9 + $0x70] sm:$0xff]
          %v1187 = vld [vmem:[#allocation9 + $0x78] sm:$0xff]
          %v1188 = vld [vmem:[#allocation10] sm:$0xff]
          %v1189 = vld [vmem:[#allocation10 + $0x8] sm:$0xff]
          %v1190 = vld [vmem:[#allocation10 + $0x10] sm:$0xff]
          %v1191 = vld [vmem:[#allocation10 + $0x18] sm:$0xff]
          %v1192 = vld [vmem:[#allocation10 + $0x20] sm:$0xff]
          %v1193 = vld [vmem:[#allocation10 + $0x28] sm:$0xff]
          %v1194 = vld [vmem:[#allocation10 + $0x30] sm:$0xff]
          %v1195 = vld [vmem:[#allocation10 + $0x38] sm:$0xff]
          %v1196 = vld [vmem:[#allocation10 + $0x40] sm:$0xff]
          %v1197 = vld [vmem:[#allocation10 + $0x48] sm:$0xff]
          %v1198 = vld [vmem:[#allocation10 + $0x50] sm:$0xff]
          %v1199 = vld [vmem:[#allocation10 + $0x58] sm:$0xff]
          %v1200 = vld [vmem:[#allocation10 + $0x60] sm:$0xff]
          %v1201 = vld [vmem:[#allocation10 + $0x68] sm:$0xff]
          %v1202 = vld [vmem:[#allocation10 + $0x70] sm:$0xff]
          %v1203 = vld [vmem:[#allocation10 + $0x78] sm:$0xff]
          %1204 = vmatpush.msra.mxu0 %v1203
          %1205 = vmatpush.msra.mxu0 %v1202
          %1206 = vmatpush.msra.mxu0 %v1201
          %1207 = vmatpush.msra.mxu0 %v1200
          %1208 = vmatpush.msra.mxu0 %v1199
          %1209 = vmatpush.msra.mxu0 %v1198
          %1210 = vmatpush.msra.mxu0 %v1197
          %1211 = vmatpush.msra.mxu0 %v1196
          %1212 = vmatpush.msra.mxu0 %v1195
          %1213 = vmatpush.msra.mxu0 %v1194
          %1214 = vmatpush.msra.mxu0 %v1193
          %1215 = vmatpush.msra.mxu0 %v1192
          %1216 = vmatpush.msra.mxu0 %v1191
          %1217 = vmatpush.msra.mxu0 %v1190
          %1218 = vmatpush.msra.mxu0 %v1189
          %1219 = vmatpush.msra.mxu0 %v1188
          %1220 = vmatmul.f32.gmra.mxu0 %v1124
          %v1221 = vpop.f32.mrf.mxu0
          %v1222 = vadd.f32 0.0, %v1221
          %1223 = vmatmul.f32.gmra.mxu0 %v1125
          %v1224 = vpop.f32.mrf.mxu0
          %v1225 = vadd.f32 0.0, %v1224
          %1226 = vmatmul.f32.gmra.mxu0 %v1126
          %v1227 = vpop.f32.mrf.mxu0
          %v1228 = vadd.f32 0.0, %v1227
          %1229 = vmatmul.f32.gmra.mxu0 %v1127
          %v1230 = vpop.f32.mrf.mxu0
          %v1231 = vadd.f32 0.0, %v1230
          %1232 = vmatmul.f32.gmra.mxu0 %v1128
          %v1233 = vpop.f32.mrf.mxu0
          %v1234 = vadd.f32 0.0, %v1233
          %1235 = vmatmul.f32.gmra.mxu0 %v1129
          %v1236 = vpop.f32.mrf.mxu0
          %v1237 = vadd.f32 0.0, %v1236
          %1238 = vmatmul.f32.gmra.mxu0 %v1130
          %v1239 = vpop.f32.mrf.mxu0
          %v1240 = vadd.f32 0.0, %v1239
          %1241 = vmatmul.f32.gmra.mxu0 %v1131
          %v1242 = vpop.f32.mrf.mxu0
          %v1243 = vadd.f32 0.0, %v1242
          %1244 = vmatmul.f32.gmra.mxu0 %v1132
          %v1245 = vpop.f32.mrf.mxu0
          %v1246 = vadd.f32 0.0, %v1245
          %1247 = vmatmul.f32.gmra.mxu0 %v1133
          %v1248 = vpop.f32.mrf.mxu0
          %v1249 = vadd.f32 0.0, %v1248
          %1250 = vmatmul.f32.gmra.mxu0 %v1134
          %v1251 = vpop.f32.mrf.mxu0
          %v1252 = vadd.f32 0.0, %v1251
          %1253 = vmatmul.f32.gmra.mxu0 %v1135
          %v1254 = vpop.f32.mrf.mxu0
          %v1255 = vadd.f32 0.0, %v1254
          %1256 = vmatmul.f32.gmra.mxu0 %v1136
          %v1257 = vpop.f32.mrf.mxu0
          %v1258 = vadd.f32 0.0, %v1257
          %1259 = vmatmul.f32.gmra.mxu0 %v1137
          %v1260 = vpop.f32.mrf.mxu0
          %v1261 = vadd.f32 0.0, %v1260
          %1262 = vmatmul.f32.gmra.mxu0 %v1138
          %v1263 = vpop.f32.mrf.mxu0
          %v1264 = vadd.f32 0.0, %v1263
          %1265 = vmatmul.f32.gmra.mxu0 %v1139
          %v1266 = vpop.f32.mrf.mxu0
          %v1267 = vadd.f32 0.0, %v1266
          %1268 = vdwg.mxu0
          %1269 = vmatpush.msra.mxu0 %v1187
          %1270 = vmatpush.msra.mxu0 %v1186
          %1271 = vmatpush.msra.mxu0 %v1185
          %1272 = vmatpush.msra.mxu0 %v1184
          %1273 = vmatpush.msra.mxu0 %v1183
          %1274 = vmatpush.msra.mxu0 %v1182
          %1275 = vmatpush.msra.mxu0 %v1181
          %1276 = vmatpush.msra.mxu0 %v1180
          %1277 = vmatpush.msra.mxu0 %v1179
          %1278 = vmatpush.msra.mxu0 %v1178
          %1279 = vmatpush.msra.mxu0 %v1177
          %1280 = vmatpush.msra.mxu0 %v1176
          %1281 = vmatpush.msra.mxu0 %v1175
          %1282 = vmatpush.msra.mxu0 %v1174
          %1283 = vmatpush.msra.mxu0 %v1173
          %1284 = vmatpush.msra.mxu0 %v1172
          %1285 = vmatmul.f32.gmra.mxu0 %v1156
          %v1286 = vpop.f32.mrf.mxu0
          %v1287 = vadd.f32 %v1222, %v1286
          %1288 = vmatmul.f32.gmra.mxu0 %v1157
          %v1289 = vpop.f32.mrf.mxu0
          %v1290 = vadd.f32 %v1225, %v1289
          %1291 = vmatmul.f32.gmra.mxu0 %v1158
          %v1292 = vpop.f32.mrf.mxu0
          %v1293 = vadd.f32 %v1228, %v1292
          %1294 = vmatmul.f32.gmra.mxu0 %v1159
          %v1295 = vpop.f32.mrf.mxu0
          %v1296 = vadd.f32 %v1231, %v1295
          %1297 = vmatmul.f32.gmra.mxu0 %v1160
          %v1298 = vpop.f32.mrf.mxu0
          %v1299 = vadd.f32 %v1234, %v1298
          %1300 = vmatmul.f32.gmra.mxu0 %v1161
          %v1301 = vpop.f32.mrf.mxu0
          %v1302 = vadd.f32 %v1237, %v1301
          %1303 = vmatmul.f32.gmra.mxu0 %v1162
          %v1304 = vpop.f32.mrf.mxu0
          %v1305 = vadd.f32 %v1240, %v1304
          %1306 = vmatmul.f32.gmra.mxu0 %v1163
          %v1307 = vpop.f32.mrf.mxu0
          %v1308 = vadd.f32 %v1243, %v1307
          %1309 = vmatmul.f32.gmra.mxu0 %v1164
          %v1310 = vpop.f32.mrf.mxu0
          %v1311 = vadd.f32 %v1246, %v1310
          %1312 = vmatmul.f32.gmra.mxu0 %v1165
          %v1313 = vpop.f32.mrf.mxu0
          %v1314 = vadd.f32 %v1249, %v1313
          %1315 = vmatmul.f32.gmra.mxu0 %v1166
          %v1316 = vpop.f32.mrf.mxu0
          %v1317 = vadd.f32 %v1252, %v1316
          %1318 = vmatmul.f32.gmra.mxu0 %v1167
          %v1319 = vpop.f32.mrf.mxu0
          %v1320 = vadd.f32 %v1255, %v1319
          %1321 = vmatmul.f32.gmra.mxu0 %v1168
          %v1322 = vpop.f32.mrf.mxu0
          %v1323 = vadd.f32 %v1258, %v1322
          %1324 = vmatmul.f32.gmra.mxu0 %v1169
          %v1325 = vpop.f32.mrf.mxu0
          %v1326 = vadd.f32 %v1261, %v1325
          %1327 = vmatmul.f32.gmra.mxu0 %v1170
          %v1328 = vpop.f32.mrf.mxu0
          %v1329 = vadd.f32 %v1264, %v1328
          %1330 = vmatmul.f32.gmra.mxu0 %v1171
          %v1331 = vpop.f32.mrf.mxu0
          %v1332 = vadd.f32 %v1267, %v1331
          %1333 = vdwg.mxu0
          %v1334 = vld [vmem:[%s5] sm:$0x1]
          %v1336 = vperm.slane %v1334, 0
          %v1338 = vadd.f32 %v1287, %v1336
          %v1339 = vadd.f32 %v1290, %v1336
          %v1340 = vadd.f32 %v1293, %v1336
          %v1341 = vadd.f32 %v1296, %v1336
          %v1342 = vadd.f32 %v1299, %v1336
          %v1343 = vadd.f32 %v1302, %v1336
          %v1344 = vadd.f32 %v1305, %v1336
          %v1345 = vadd.f32 %v1308, %v1336
          %v1346 = vadd.f32 %v1311, %v1336
          %v1347 = vadd.f32 %v1314, %v1336
          %v1348 = vadd.f32 %v1317, %v1336
          %v1349 = vadd.f32 %v1320, %v1336
          %v1350 = vadd.f32 %v1323, %v1336
          %v1351 = vadd.f32 %v1326, %v1336
          %v1352 = vadd.f32 %v1329, %v1336
          %v1353 = vadd.f32 %v1332, %v1336
          %v1354 = vmax.f32 %v1338, 0.0
          %v1355 = vmax.f32 %v1339, 0.0
          %v1356 = vmax.f32 %v1340, 0.0
          %v1357 = vmax.f32 %v1341, 0.0
          %v1358 = vmax.f32 %v1342, 0.0
          %v1359 = vmax.f32 %v1343, 0.0
          %v1360 = vmax.f32 %v1344, 0.0
          %v1361 = vmax.f32 %v1345, 0.0
          %v1362 = vmax.f32 %v1346, 0.0
          %v1363 = vmax.f32 %v1347, 0.0
          %v1364 = vmax.f32 %v1348, 0.0
          %v1365 = vmax.f32 %v1349, 0.0
          %v1366 = vmax.f32 %v1350, 0.0
          %v1367 = vmax.f32 %v1351, 0.0
          %v1368 = vmax.f32 %v1352, 0.0
          %v1369 = vmax.f32 %v1353, 0.0
          %1370 = vst [vmem:[%s377] sm:$0xff] %v1354
          %1371 = vst [vmem:[%s377 + $0x8] sm:$0xff] %v1355
          %1372 = vst [vmem:[%s377 + $0x10] sm:$0xff] %v1356
          %1373 = vst [vmem:[%s377 + $0x18] sm:$0xff] %v1357
          %1374 = vst [vmem:[%s377 + $0x20] sm:$0xff] %v1358
          %1375 = vst [vmem:[%s377 + $0x28] sm:$0xff] %v1359
          %1376 = vst [vmem:[%s377 + $0x30] sm:$0xff] %v1360
          %1377 = vst [vmem:[%s377 + $0x38] sm:$0xff] %v1361
          %1378 = vst [vmem:[%s377 + $0x40] sm:$0xff] %v1362
          %1379 = vst [vmem:[%s377 + $0x48] sm:$0xff] %v1363
          %1380 = vst [vmem:[%s377 + $0x50] sm:$0xff] %v1364
          %1381 = vst [vmem:[%s377 + $0x58] sm:$0xff] %v1365
          %1382 = vst [vmem:[%s377 + $0x60] sm:$0xff] %v1366
          %1383 = vst [vmem:[%s377 + $0x68] sm:$0xff] %v1367
          %1384 = vst [vmem:[%s377 + $0x70] sm:$0xff] %v1368
          %1385 = vst [vmem:[%s377 + $0x78] sm:$0xff] %v1369
        $region72: #{tpu_custom_call.1} parent=43 // pred_fallthru
          _
        %s1386 = sand.u32 %s183, 1
        %s1387 = scalar_lea.sflag [#allocation5], %s1386
        %s1388 = sand.u32 %s183, 1
        %s1389 = smul.addr %s1388, 128
        %s1390 = scalar_lea.vmem [#allocation12], %s1389
        // Predicated region
        $region73: #{tpu_custom_call.1} parent=43 // pred_check
          %p1391 = pneg %p193
        $region74: #{tpu_custom_call.1} parent=43 // pred_check_branch
          %1393 = sbr.rel (%p1391) target = $region76
        $region75: #{tpu_custom_call.1} parent=43 // pred_region
          %s1394 = smul.u32 16, %s29
          %1396 = vsyncadd %s1387, 0
          %s1397 = smul.addr %s1394, 8
          %s1398 = scalar_lea.hbm %s6, %s1397
          %s1399 = sshll.u32 %s1390, 4
          %s1400 = int_to_ptr.vmem [resolvable:$true] %s1399
          %s1401 = sshll.u32 %s1398, 4
          %s1402 = int_to_ptr.hbm [resolvable:$true] %s1401
          %1407 = dma.vmem_to_hbm [thread:$0]  %s1400, 2048, %s1402, %s1387, 128, 128, 8
        $region76: #{tpu_custom_call.1} parent=43 // pred_fallthru
          _
      $region44: #{tpu_custom_call.1} parent=5 // pred_fallthru
        _
      %p1408 = scmp.le.s32.totalorder 2, %s20
      // Predicated region
      $region77: #{tpu_custom_call.1} parent=5 // pred_check
        %p1409 = pneg %p1408
      $region78: #{tpu_custom_call.1} parent=5 // pred_check_branch
        %1411 = sbr.rel (%p1409) target = $region80
      $region79: #{tpu_custom_call.1} parent=5 // pred_region
        %s1412 = ssub.s32 %s20, 2
        // Predicated region
        $region81: #{tpu_custom_call.1} parent=79 // pred_check
          %p1413 = pneg %p199
        $region82: #{tpu_custom_call.1} parent=79 // pred_check_branch
          %1415 = sbr.rel (%p1413) target = $region84
        $region83: #{tpu_custom_call.1} parent=79 // pred_region
          %s1416 = sand.u32 %s184, 1
          %s1417 = scalar_lea.sflag [#allocation5], %s1416
          %s1418 = sand.u32 %s184, 1
          %s1419 = smul.addr %s1418, 128
          %s1420 = scalar_lea.vmem [#allocation12], %s1419
          %1422 = dma.done %s1417, 2048
        $region84: #{tpu_custom_call.1} parent=79 // pred_fallthru
          _
      $region80: #{tpu_custom_call.1} parent=5 // pred_fallthru
        _
    $region6: #{tpu_custom_call.1} parent=1 // loop_footer
      %s24 = sadd.s32 1, %s20
    $region7: #{tpu_custom_call.1} parent=1 // loop_footer_branch
      %19 = sbr.rel target = $region3
    $region8: #{tpu_custom_call.1} parent=1 // loop_exit
      _
    %1423 = vsyncpa [#allocation4], 1
    %s1424 = scalar_lea.sflag [#allocation4], 1
    %1425 = vsyncpa %s1424, 1
    %1426 = vsyncpa [#allocation7], 1
    %1427 = vsyncpa [#allocation11], 1
    %1428 = vsyncpa [#allocation5], 1
    %s1429 = scalar_lea.sflag [#allocation5], 1
    %1430 = vsyncpa %s1429, 1

</llo_original>
